<compile_context>
chip_gen: v7x
topology: tpu7x:2x2x1
jax: 0.10.0
libtpu: 0.0.40
codegen_flags: <defaults>
</compile_context>

<pallas_src>
import math
import functools

import jax
import jax.numpy as jnp
import numpy as np
from jax.experimental import pallas as pl
from jax.experimental.pallas import tpu as pltpu


_LAYER_PARAMS = ("ln1_w", "ln1_b", "wqkv", "bqkv", "wo", "bo",
                 "ln2_w", "ln2_b", "w1", "b1", "w2", "b2")
_HEAD_PARAMS = ("lnf_w", "lnf_b", "wc", "bc")


def _layernorm(x, w, b, eps):
    mu = jnp.mean(x, axis=-1, keepdims=True)
    var = jnp.mean((x - mu) ** 2, axis=-1, keepdims=True)
    return (x - mu) * jax.lax.rsqrt(var + eps) * w + b


# ----------------------------- Pallas kernel -------------------------------

def transformer_layer_kernel(x_ref, mask_ref,
                             ln1_w, ln1_b, wqkv, bqkv, wo, bo,
                             ln2_w, ln2_b, w1, b1, w2, b2,
                             lnf_w, lnf_b, wc, bc,
                             out_ref, x_scr,
                             *, nhead, eps):
    """One encoder layer per grid step (layer axis = streamed weights); the residual
    stream stays resident in VMEM scratch.  The classifier head runs on the last
    layer iteration."""
    l = pl.program_id(1)
    BB, S, D = x_ref.shape
    H = nhead
    dh = D // H
    rows = BB * S
    inv_sqrt2 = 1.0 / math.sqrt(2.0)
    bf16 = jnp.bfloat16

    # Load the input batch block into the resident activation scratch once per batch block.
    @pl.when(l == 0)
    def _():
        x_scr[...] = x_ref[...].reshape(rows, D)

    x = x_scr[...]                      # (rows, D) f32 residual stream
    mask = mask_ref[...]                # (BB, 1, 1, S) f32 additive key-padding mask

    # ---- self-attention block (pre-norm):  x = x + W_o . MHA(LN1(x)) ----
    xn = _layernorm(x, ln1_w[...], ln1_b[...], eps)
    # Single fused (rows, D) x (D, 3D) bf16 matmul.  The wrapper permuted the columns
    # to head-major (h, {q,k,v}, dh) order and folded 1/sqrt(dh) into the Q columns.
    qkv = jnp.dot(xn.astype(bf16), wqkv[...],
                  preferred_element_type=jnp.float32) + bqkv[...]

    # One head-major relayout of the fused qkv tensor (H contiguous lane-chunk copies)
    # instead of 3H narrow per-tensor slices + per-head output concat.
    qkv_hm = jnp.concatenate(
        [qkv[:, h * 3 * dh:(h + 1) * 3 * dh].reshape(BB, 1, S, 3 * dh)
         for h in range(H)], axis=1).reshape(BB * H, S, 3 * dh)
    q = qkv_hm[:, :, 0:dh].astype(bf16)          # attention scale already baked into W_q
    k = qkv_hm[:, :, dh:2 * dh].astype(bf16)
    v = qkv_hm[:, :, 2 * dh:3 * dh].astype(bf16)

    # Batched-over-(batch*head) MXU contractions; softmax math stays f32 (mask is f32).
    s = jnp.einsum("nqd,nkd->nqk", q, k, preferred_element_type=jnp.float32)
    s = s.reshape(BB, H, S, S) + mask
    s = s - jnp.max(s, axis=-1, keepdims=True)
    p = jnp.exp(s)
    p = p / jnp.sum(p, axis=-1, keepdims=True)   # exact normalization (bf16-safe)
    o = jnp.einsum("nqk,nkd->nqd",
                   p.reshape(BB * H, S, S).astype(bf16), v,
                   preferred_element_type=jnp.float32)       # (BB*H, S, dh)

    # Head merge folded into the output projection: attn = sum_h O_h @ W_o[h].
    # Only major-dim slices -> no lane-masked merge copies; work goes to the MXU.
    o4 = o.reshape(BB, H, S, dh)
    wo_all = wo[...]                              # (H, dh, D) bf16
    attn = jnp.zeros((rows, D), jnp.float32)
    for h in range(H):
        attn = attn + jnp.dot(o4[:, h].reshape(rows, dh).astype(bf16), wo_all[h],
                              preferred_element_type=jnp.float32)
    x = x + attn + bo[...]

    # ---- feed-forward block (pre-norm):  x = x + W2 . gelu(W1 . LN2(x) + b1) + b2 ----
    xn = _layernorm(x, ln2_w[...], ln2_b[...], eps)
    h1 = jnp.dot(xn.astype(bf16), w1[...], preferred_element_type=jnp.float32) + b1[...]
    h1 = 0.5 * h1 * (1.0 + jax.lax.erf(h1 * inv_sqrt2))      # exact GELU (F.gelu)
    x = x + jnp.dot(h1.astype(bf16), w2[...], preferred_element_type=jnp.float32) + b2[...]
    x_scr[...] = x

    # ---- classifier head on the last layer: final LN -> mean(seq) -> Linear -> Sigmoid ----
    @pl.when(l == pl.num_programs(1) - 1)
    def _():
        xf = _layernorm(x, lnf_w[...], lnf_b[...], eps)
        pooled = jnp.mean(xf.reshape(BB, S, D), axis=1)       # includes padded positions (as in PyTorch)
        logits = jnp.dot(pooled.astype(bf16), wc[...],
                         preferred_element_type=jnp.float32) + bc[...]
        out_ref[...] = jax.nn.sigmoid(logits)                 # lane-dense (BB, L) store


# ----------------------------- wrapper --------------------------------------

def _prepare_kernel_params(params, *, nhead):
    """Free, wrapper-side weight re-layout:
      * fused QKV columns permuted to head-major (h, {q,k,v}, dh) order,
      * attention scale 1/sqrt(dh) baked into the Q columns (weight AND bias),
      * W_o reshaped to (H, dh, D) so the head merge folds into the output projection.
    Matmul weights stay bf16; biases / LN params stay f32."""
    p = dict(params)
    NL, D, _ = params["wqkv"].shape
    H = nhead
    dh = D // H
    scale = 1.0 / math.sqrt(dh)

    def permute_cols(w, lead):
        w = w.astype(jnp.float32).reshape(*lead, 3, H, dh)
        w = w.at[..., 0, :, :].multiply(scale)        # fold scale into Q columns
        w = jnp.moveaxis(w, -3, -2)                   # (..., H, 3, dh)
        return w.reshape(*lead, 3 * D)

    p["wqkv"] = permute_cols(params["wqkv"], (NL, D)).astype(jnp.bfloat16)
    p["bqkv"] = permute_cols(params["bqkv"], (NL, 1)).astype(jnp.float32)
    p["wo"] = params["wo"].reshape(NL, H, dh, D)
    return p


def transformer_classifier_forward(src, src_key_padding_mask, params,
                                   *, nhead, num_layers, eps, batch_blocks=None):
    B, S, D = src.shape
    L = params["wc"].shape[-1]
    assert params["wqkv"].shape[0] == num_layers and D % nhead == 0

    kp = _prepare_kernel_params(params, nhead=nhead)

    # bool key-padding mask (True = pad) -> additive f32 mask, broadcast over (head, query)
    mask_add = jnp.where(src_key_padding_mask, -1e9, 0.0).astype(jnp.float32)
    mask_add = mask_add.reshape(B, 1, 1, S)

    # Batch-block grid: only split when each block still has MXU-filling row counts.
    # On single-TensorCore chips (v5e/v6e) and at small shapes a split is pure overhead.
    if batch_blocks is None:
        batch_blocks = 2 if (B % 2 == 0 and (B // 2) % 8 == 0
                             and (B // 2) * S >= 256) else 1
    assert B % batch_blocks == 0
    BB = B // batch_blocks

    def layer_spec(name):                 # per-layer weights: streamed along the layer axis
        shp = kp[name].shape              # (NL, ...)
        nrest = len(shp) - 1
        return pl.BlockSpec((None,) + shp[1:],
                            lambda b, l, _n=nrest: (l,) + (0,) * _n)

    def const_spec(name):                 # head weights: constant block index (tiny)
        shp = kp[name].shape
        nd = len(shp)
        return pl.BlockSpec(shp, lambda b, l, _n=nd: (0,) * _n)

    in_specs = (
        [pl.BlockSpec((BB, S, D), lambda b, l: (b, 0, 0)),         # activations (resident per b)
         pl.BlockSpec((BB, 1, 1, S), lambda b, l: (b, 0, 0, 0))]   # additive key-padding mask
        + [layer_spec(n) for n in _LAYER_PARAMS]
        + [const_spec(n) for n in _HEAD_PARAMS]
    )

    # Explicit scoped-VMEM budget (default 16/32 MiB limits are exceeded long before
    # the physical cap at production shapes); scale to this chip's capacity.
    try:
        vmem_cap = pltpu.get_tpu_info().vmem_capacity_bytes
        vmem_limit = min(int(0.75 * vmem_cap), 96 * 1024 * 1024)
    except Exception:
        vmem_limit = 32 * 1024 * 1024

    out = pl.pallas_call(
        functools.partial(transformer_layer_kernel, nhead=nhead, eps=eps),
        out_shape=jax.ShapeDtypeStruct((B, L), jnp.float32),
        grid=(batch_blocks, num_layers),
        in_specs=in_specs,
        out_specs=pl.BlockSpec((BB, L), lambda b, l: (b, 0)),
        scratch_shapes=[pltpu.VMEM((BB * S, D), jnp.float32)],     # resident residual stream
        compiler_params=pltpu.CompilerParams(
            dimension_semantics=("parallel", "arbitrary"),
            vmem_limit_bytes=vmem_limit,
        ),
    )(src, mask_add, *(kp[n] for n in _LAYER_PARAMS), *(kp[n] for n in _HEAD_PARAMS))
    return out


# ----------------------------- params / reference ---------------------------

def init_params(key, *, d_model, nhead, num_layers, dim_ff, labels):
    def xavier(k, shape, dtype=jnp.float32):
        fan_in, fan_out = shape[-2], shape[-1]
        a = math.sqrt(6.0 / (fan_in + fan_out))
        return jax.random.uniform(k, shape, jnp.float32, -a, a).astype(dtype)

    D, F, NL = d_model, dim_ff, num_layers
    bf16 = jnp.bfloat16                 # matmul weights are stored MXU-native bf16
    key, *ks = jax.random.split(key, 9)
    return dict(
        ln1_w=jnp.ones((NL, 1, D), jnp.float32),
        ln1_b=jnp.zeros((NL, 1, D), jnp.float32),
        wqkv=xavier(ks[0], (NL, D, 3 * D), bf16),
        bqkv=jnp.zeros((NL, 1, 3 * D), jnp.float32),
        wo=xavier(ks[1], (NL, D, D), bf16),
        bo=jnp.zeros((NL, 1, D), jnp.float32),
        ln2_w=jnp.ones((NL, 1, D), jnp.float32),
        ln2_b=jnp.zeros((NL, 1, D), jnp.float32),
        w1=xavier(ks[2], (NL, D, F), bf16),
        b1=0.01 * jax.random.normal(ks[3], (NL, 1, F), jnp.float32),
        w2=xavier(ks[4], (NL, F, D), bf16),
        b2=0.01 * jax.random.normal(ks[5], (NL, 1, D), jnp.float32),
        lnf_w=jnp.ones((1, D), jnp.float32),
        lnf_b=jnp.zeros((1, D), jnp.float32),
        wc=xavier(ks[6], (D, labels), bf16),
        bc=0.01 * jax.random.normal(ks[7], (1, labels), jnp.float32),
    )


def reference_forward(src, mask_bool, p, *, nhead, num_layers, eps):
    """Pure-JAX f32 reference (same math as the PyTorch eval-mode forward)."""
    def f32(a): return a.astype(jnp.float32)

    def ln(x, w, b):
        mu = x.mean(-1, keepdims=True)
        var = ((x - mu) ** 2).mean(-1, keepdims=True)
        return (x - mu) * jax.lax.rsqrt(var + eps) * w + b

    B, S, D = src.shape
    dh = D // nhead
    mask_add = jnp.where(mask_bool, -1e9, 0.0)[:, None, None, :]
    x = src
    for l in range(num_layers):
        xn = ln(x, p["ln1_w"][l], p["ln1_b"][l])
        qkv = xn @ f32(p["wqkv"][l]) + p["bqkv"][l]
        q, k, v = jnp.split(qkv, 3, axis=-1)
        q = q.reshape(B, S, nhead, dh).transpose(0, 2, 1, 3)
        k = k.reshape(B, S, nhead, dh).transpose(0, 2, 1, 3)
        v = v.reshape(B, S, nhead, dh).transpose(0, 2, 1, 3)
        s = jnp.einsum("bhqd,bhkd->bhqk", q, k) / math.sqrt(dh) + mask_add
        a = jax.nn.softmax(s, axis=-1)
        attn = jnp.einsum("bhqk,bhkd->bhqd", a, v).transpose(0, 2, 1, 3).reshape(B, S, D)
        x = x + attn @ f32(p["wo"][l]) + p["bo"][l]
        xn = ln(x, p["ln2_w"][l], p["ln2_b"][l])
        h1 = xn @ f32(p["w1"][l]) + p["b1"][l]
        h1 = 0.5 * h1 * (1.0 + jax.lax.erf(h1 / math.sqrt(2.0)))
        x = x + h1 @ f32(p["w2"][l]) + p["b2"][l]
    xn = ln(x, p["lnf_w"], p["lnf_b"])
    pooled = xn.mean(axis=1)
    return jax.nn.sigmoid(pooled @ f32(p["wc"]) + p["bc"])


# ----------------------------- main ------------------------------------------

if __name__ == "__main__":
    # Small shapes consistent with the module (scaled-down d_model / ff / layers)
    D_MODEL, NHEAD, NUM_LAYERS, DIM_FF, LABELS = 32, 4, 2, 64, 7
    B, S = 2, 8
    EPS = 1e-5

    key = jax.random.PRNGKey(0)
    kp, kx = jax.random.split(key)
    params = init_params(kp, d_model=D_MODEL, nhead=NHEAD,
                         num_layers=NUM_LAYERS, dim_ff=DIM_FF, labels=LABELS)

    src = jax.random.normal(kx, (B, S, D_MODEL), jnp.float32)
    # key-padding mask: True = padded token (ignored as attention key)
    src_key_padding_mask = jnp.array(
        [[False] * S,
         [False] * (S - 3) + [True] * 3], dtype=bool)

    out = transformer_classifier_forward(src, src_key_padding_mask, params,
                                         nhead=NHEAD, num_layers=NUM_LAYERS, eps=EPS)
    out = jax.block_until_ready(out)

    ref = reference_forward(src, src_key_padding_mask, params,
                            nhead=NHEAD, num_layers=NUM_LAYERS, eps=EPS)
    assert out.shape == (B, LABELS)
    # kernel uses bf16 MXU operands (f32 accumulation); reference is pure f32
    np.testing.assert_allclose(np.asarray(out), np.asarray(ref),
                               atol=2e-2, rtol=2e-2)
    print("KERNEL_OK")
</pallas_src>

<mosaic_0001>
module attributes {stable_mosaic.version = 11 : i64} {
  func.func @transformer_layer_kernel(%arg0: i32, %arg1: i32, %arg2: memref<2x8x32xf32, #tpu.memory_space<vmem>>, %arg3: memref<2x1x1x8xf32, #tpu.memory_space<vmem>>, %arg4: memref<1x1x32xf32, #tpu.memory_space<vmem>>, %arg5: memref<1x1x32xf32, #tpu.memory_space<vmem>>, %arg6: memref<1x32x96xbf16, #tpu.memory_space<vmem>>, %arg7: memref<1x1x96xf32, #tpu.memory_space<vmem>>, %arg8: memref<1x4x8x32xbf16, #tpu.memory_space<vmem>>, %arg9: memref<1x1x32xf32, #tpu.memory_space<vmem>>, %arg10: memref<1x1x32xf32, #tpu.memory_space<vmem>>, %arg11: memref<1x1x32xf32, #tpu.memory_space<vmem>>, %arg12: memref<1x32x64xbf16, #tpu.memory_space<vmem>>, %arg13: memref<1x1x64xf32, #tpu.memory_space<vmem>>, %arg14: memref<1x64x32xbf16, #tpu.memory_space<vmem>>, %arg15: memref<1x1x32xf32, #tpu.memory_space<vmem>>, %arg16: memref<1x32xf32, #tpu.memory_space<vmem>>, %arg17: memref<1x32xf32, #tpu.memory_space<vmem>>, %arg18: memref<32x7xbf16, #tpu.memory_space<vmem>>, %arg19: memref<1x7xf32, #tpu.memory_space<vmem>>, %arg20: memref<2x7xf32, #tpu.memory_space<vmem>>, %arg21: memref<16x32xf32, #tpu.memory_space<vmem>>) attributes {dimension_semantics = [#tpu.dimension_semantics<parallel>, #tpu.dimension_semantics<arbitrary>], iteration_bounds = array<i64: 1, 2>, scalar_prefetch = 0 : i64, scratch_operands = 1 : i64, tpu.core_type = #tpu.core_type<tc>, window_params = [{transform_indices = @transform_0, window_bounds = array<i64: 2, 8, 32>}, {transform_indices = @transform_1, window_bounds = array<i64: 2, 1, 1, 8>}, {transform_indices = @transform_2, window_bounds = array<i64: 1, 1, 32>}, {transform_indices = @transform_3, window_bounds = array<i64: 1, 1, 32>}, {transform_indices = @transform_4, window_bounds = array<i64: 1, 32, 96>}, {transform_indices = @transform_5, window_bounds = array<i64: 1, 1, 96>}, {transform_indices = @transform_6, window_bounds = array<i64: 1, 4, 8, 32>}, {transform_indices = @transform_7, window_bounds = array<i64: 1, 1, 32>}, {transform_indices = @transform_8, window_bounds = array<i64: 1, 1, 32>}, {transform_indices = @transform_9, window_bounds = array<i64: 1, 1, 32>}, {transform_indices = @transform_10, window_bounds = array<i64: 1, 32, 64>}, {transform_indices = @transform_11, window_bounds = array<i64: 1, 1, 64>}, {transform_indices = @transform_12, window_bounds = array<i64: 1, 64, 32>}, {transform_indices = @transform_13, window_bounds = array<i64: 1, 1, 32>}, {pipeline_mode = #tpu.pipeline_mode<synchronous>, transform_indices = @transform_14, window_bounds = array<i64: 1, 32>}, {pipeline_mode = #tpu.pipeline_mode<synchronous>, transform_indices = @transform_15, window_bounds = array<i64: 1, 32>}, {pipeline_mode = #tpu.pipeline_mode<synchronous>, transform_indices = @transform_16, window_bounds = array<i64: 32, 7>}, {pipeline_mode = #tpu.pipeline_mode<synchronous>, transform_indices = @transform_17, window_bounds = array<i64: 1, 7>}, {transform_indices = @transform_18, window_bounds = array<i64: 2, 7>}]} {
    %c0_i32 = arith.constant 0 : i32
    %0 = arith.cmpi eq, %arg1, %c0_i32 : i32
    %1 = arith.extui %0 : i1 to i32
    %c0_i32_0 = arith.constant 0 : i32
    %2 = arith.cmpi ne, %1, %c0_i32_0 : i32
    scf.if %2 {
      %c0_70 = arith.constant 0 : index
      %c0_71 = arith.constant 0 : index
      %c0_72 = arith.constant 0 : index
      %167 = vector.load %arg2[%c0_70, %c0_71, %c0_72] : memref<2x8x32xf32, #tpu.memory_space<vmem>>, vector<2x8x32xf32>
      %168 = vector.shape_cast %167 : vector<2x8x32xf32> to vector<16x32xf32>
      %c0_73 = arith.constant 0 : index
      %c0_74 = arith.constant 0 : index
      %169 = vector.load %arg21[%c0_73, %c0_74] : memref<16x32xf32, #tpu.memory_space<vmem>>, vector<16x32xf32>
      tpu.vector_store %arg21[%c0_73, %c0_74], %168 {strides = array<i32>} : memref<16x32xf32, #tpu.memory_space<vmem>>, vector<16x32xf32>,
    } else {
    }
    %c0 = arith.constant 0 : index
    %c0_1 = arith.constant 0 : index
    %3 = vector.load %arg21[%c0, %c0_1] : memref<16x32xf32, #tpu.memory_space<vmem>>, vector<16x32xf32>
    %c0_2 = arith.constant 0 : index
    %c0_3 = arith.constant 0 : index
    %c0_4 = arith.constant 0 : index
    %c0_5 = arith.constant 0 : index
    %4 = vector.load %arg3[%c0_2, %c0_3, %c0_4, %c0_5] : memref<2x1x1x8xf32, #tpu.memory_space<vmem>>, vector<2x1x1x8xf32>
    %c0_6 = arith.constant 0 : index
    %c0_7 = arith.constant 0 : index
    %c0_8 = arith.constant 0 : index
    %5 = vector.load %arg4[%c0_6, %c0_7, %c0_8] : memref<1x1x32xf32, #tpu.memory_space<vmem>>, vector<1x1x32xf32>
    %6 = vector.shape_cast %5 : vector<1x1x32xf32> to vector<1x32xf32>
    %c0_9 = arith.constant 0 : index
    %c0_10 = arith.constant 0 : index
    %c0_11 = arith.constant 0 : index
    %7 = vector.load %arg5[%c0_9, %c0_10, %c0_11] : memref<1x1x32xf32, #tpu.memory_space<vmem>>, vector<1x1x32xf32>
    %8 = vector.shape_cast %7 : vector<1x1x32xf32> to vector<1x32xf32>
    %cst = arith.constant dense<0.000000e+00> : vector<16xf32>
    %9 = vector.multi_reduction <add>, %3, %cst [1] : vector<16x32xf32> to vector<16xf32>
    %10 = vector.shape_cast %9 : vector<16xf32> to vector<16x1xf32>
    %cst_12 = arith.constant 3.200000e+01 : f32
    %11 = vector.broadcast %cst_12 : f32 to vector<16x1xf32>
    %12 = arith.divf %10, %11 : vector<16x1xf32>
    %13 = vector.broadcast %12 : vector<16x1xf32> to vector<16x32xf32>
    %14 = arith.subf %3, %13 : vector<16x32xf32>
    %15 = arith.mulf %14, %14 : vector<16x32xf32>
    %cst_13 = arith.constant dense<0.000000e+00> : vector<16xf32>
    %16 = vector.multi_reduction <add>, %15, %cst_13 [1] : vector<16x32xf32> to vector<16xf32>
    %17 = vector.shape_cast %16 : vector<16xf32> to vector<16x1xf32>
    %cst_14 = arith.constant 3.200000e+01 : f32
    %18 = vector.broadcast %cst_14 : f32 to vector<16x1xf32>
    %19 = arith.divf %17, %18 : vector<16x1xf32>
    %20 = vector.broadcast %12 : vector<16x1xf32> to vector<16x32xf32>
    %21 = arith.subf %3, %20 : vector<16x32xf32>
    %cst_15 = arith.constant 9.99999974E-6 : f32
    %22 = vector.broadcast %cst_15 : f32 to vector<16x1xf32>
    %23 = arith.addf %19, %22 : vector<16x1xf32>
    %24 = math.rsqrt %23 : vector<16x1xf32>
    %25 = vector.broadcast %24 : vector<16x1xf32> to vector<16x32xf32>
    %26 = arith.mulf %21, %25 : vector<16x32xf32>
    %27 = vector.broadcast %6 : vector<1x32xf32> to vector<16x32xf32>
    %28 = arith.mulf %26, %27 : vector<16x32xf32>
    %29 = vector.broadcast %8 : vector<1x32xf32> to vector<16x32xf32>
    %30 = arith.addf %28, %29 : vector<16x32xf32>
    %31 = arith.truncf %30 : vector<16x32xf32> to vector<16x32xbf16>
    %c0_16 = arith.constant 0 : index
    %c0_17 = arith.constant 0 : index
    %c0_18 = arith.constant 0 : index
    %32 = vector.load %arg6[%c0_16, %c0_17, %c0_18] : memref<1x32x96xbf16, #tpu.memory_space<vmem>>, vector<1x32x96xbf16>
    %33 = vector.shape_cast %32 : vector<1x32x96xbf16> to vector<32x96xbf16>
    %cst_19 = arith.constant dense<0.000000e+00> : vector<16x96xf32>
    %34 = tpu.matmul %31, %33, %cst_19 {dimension_numbers = #tpu.dot_dimension_numbers<[1], [0], [0], [1], [0, 0, 1, 1], [], []>} : vector<16x32xbf16>, vector<32x96xbf16>, vector<16x96xf32> -> vector<16x96xf32>
    %c0_20 = arith.constant 0 : index
    %c0_21 = arith.constant 0 : index
    %c0_22 = arith.constant 0 : index
    %35 = vector.load %arg7[%c0_20, %c0_21, %c0_22] : memref<1x1x96xf32, #tpu.memory_space<vmem>>, vector<1x1x96xf32>
    %36 = vector.shape_cast %35 : vector<1x1x96xf32> to vector<1x96xf32>
    %37 = vector.broadcast %36 : vector<1x96xf32> to vector<16x96xf32>
    %38 = arith.addf %34, %37 : vector<16x96xf32>
    %39 = vector.extract_strided_slice %38 {offsets = [0, 0], sizes = [16, 24], strides = [1, 1]} : vector<16x96xf32> to vector<16x24xf32>
    %40 = vector.shape_cast %39 : vector<16x24xf32> to vector<2x1x8x24xf32>
    %41 = vector.extract_strided_slice %38 {offsets = [0, 24], sizes = [16, 24], strides = [1, 1]} : vector<16x96xf32> to vector<16x24xf32>
    %42 = vector.shape_cast %41 : vector<16x24xf32> to vector<2x1x8x24xf32>
    %43 = vector.extract_strided_slice %38 {offsets = [0, 48], sizes = [16, 24], strides = [1, 1]} : vector<16x96xf32> to vector<16x24xf32>
    %44 = vector.shape_cast %43 : vector<16x24xf32> to vector<2x1x8x24xf32>
    %45 = vector.extract_strided_slice %38 {offsets = [0, 72], sizes = [16, 24], strides = [1, 1]} : vector<16x96xf32> to vector<16x24xf32>
    %46 = vector.shape_cast %45 : vector<16x24xf32> to vector<2x1x8x24xf32>
    %47 = tpu.concatenate %40, %42, %44, %46 in 1 : vector<2x1x8x24xf32>, vector<2x1x8x24xf32>, vector<2x1x8x24xf32>, vector<2x1x8x24xf32> -> vector<2x4x8x24xf32>
    %48 = vector.shape_cast %47 : vector<2x4x8x24xf32> to vector<8x8x24xf32>
    %49 = vector.extract_strided_slice %48 {offsets = [0, 0, 0], sizes = [8, 8, 8], strides = [1, 1, 1]} : vector<8x8x24xf32> to vector<8x8x8xf32>
    %50 = arith.truncf %49 : vector<8x8x8xf32> to vector<8x8x8xbf16>
    %51 = vector.extract_strided_slice %48 {offsets = [0, 0, 8], sizes = [8, 8, 8], strides = [1, 1, 1]} : vector<8x8x24xf32> to vector<8x8x8xf32>
    %52 = arith.truncf %51 : vector<8x8x8xf32> to vector<8x8x8xbf16>
    %53 = vector.extract_strided_slice %48 {offsets = [0, 0, 16], sizes = [8, 8, 8], strides = [1, 1, 1]} : vector<8x8x24xf32> to vector<8x8x8xf32>
    %54 = arith.truncf %53 : vector<8x8x8xf32> to vector<8x8x8xbf16>
    "tpu.trace_start"() <{level = 10 : i32, message = "nqd,nkd->nqk"}> : () -> ()
    %cst_23 = arith.constant dense<0.000000e+00> : vector<8x8x8xf32>
    %55 = tpu.matmul %50, %52, %cst_23 {dimension_numbers = #tpu.dot_dimension_numbers<[2], [2], [1], [1], [0, 0, 0, 1, 1, 1], [0], [0]>} : vector<8x8x8xbf16>, vector<8x8x8xbf16>, vector<8x8x8xf32> -> vector<8x8x8xf32>
    "tpu.trace_stop"() : () -> ()
    %56 = vector.shape_cast %55 : vector<8x8x8xf32> to vector<2x4x8x8xf32>
    %57 = vector.broadcast %4 : vector<2x1x1x8xf32> to vector<2x4x8x8xf32>
    %58 = arith.addf %56, %57 : vector<2x4x8x8xf32>
    %cst_24 = arith.constant dense<0xFF800000> : vector<2x4x8xf32>
    %59 = vector.multi_reduction <maximumf>, %58, %cst_24 [3] : vector<2x4x8x8xf32> to vector<2x4x8xf32>
    %60 = vector.shape_cast %59 : vector<2x4x8xf32> to vector<2x4x8x1xf32>
    %61 = vector.broadcast %60 : vector<2x4x8x1xf32> to vector<2x4x8x8xf32>
    %62 = arith.subf %58, %61 : vector<2x4x8x8xf32>
    %63 = math.exp %62 : vector<2x4x8x8xf32>
    %cst_25 = arith.constant dense<0.000000e+00> : vector<2x4x8xf32>
    %64 = vector.multi_reduction <add>, %63, %cst_25 [3] : vector<2x4x8x8xf32> to vector<2x4x8xf32>
    %65 = vector.shape_cast %64 : vector<2x4x8xf32> to vector<2x4x8x1xf32>
    %66 = vector.broadcast %65 : vector<2x4x8x1xf32> to vector<2x4x8x8xf32>
    %67 = arith.divf %63, %66 : vector<2x4x8x8xf32>
    %68 = vector.shape_cast %67 : vector<2x4x8x8xf32> to vector<8x8x8xf32>
    %69 = arith.truncf %68 : vector<8x8x8xf32> to vector<8x8x8xbf16>
    "tpu.trace_start"() <{level = 10 : i32, message = "nqk,nkd->nqd"}> : () -> ()
    %cst_26 = arith.constant dense<0.000000e+00> : vector<8x8x8xf32>
    %70 = tpu.matmul %69, %54, %cst_26 {dimension_numbers = #tpu.dot_dimension_numbers<[2], [1], [1], [2], [0, 0, 0, 1, 1, 2], [0], [0]>} : vector<8x8x8xbf16>, vector<8x8x8xbf16>, vector<8x8x8xf32> -> vector<8x8x8xf32>
    "tpu.trace_stop"() : () -> ()
    %71 = vector.shape_cast %70 : vector<8x8x8xf32> to vector<2x4x8x8xf32>
    %c0_27 = arith.constant 0 : index
    %c0_28 = arith.constant 0 : index
    %c0_29 = arith.constant 0 : index
    %c0_30 = arith.constant 0 : index
    %72 = vector.load %arg8[%c0_27, %c0_28, %c0_29, %c0_30] : memref<1x4x8x32xbf16, #tpu.memory_space<vmem>>, vector<1x4x8x32xbf16>
    %73 = vector.shape_cast %72 : vector<1x4x8x32xbf16> to vector<4x8x32xbf16>
    %cst_31 = arith.constant 0.000000e+00 : f32
    %74 = vector.broadcast %cst_31 : f32 to vector<16x32xf32>
    %75 = vector.extract_strided_slice %71 {offsets = [0, 0, 0, 0], sizes = [2, 1, 8, 8], strides = [1, 1, 1, 1]} : vector<2x4x8x8xf32> to vector<2x1x8x8xf32>
    %76 = vector.shape_cast %75 : vector<2x1x8x8xf32> to vector<2x8x8xf32>
    %77 = vector.shape_cast %76 : vector<2x8x8xf32> to vector<16x8xf32>
    %78 = arith.truncf %77 : vector<16x8xf32> to vector<16x8xbf16>
    %79 = vector.extract_strided_slice %73 {offsets = [0, 0, 0], sizes = [1, 8, 32], strides = [1, 1, 1]} : vector<4x8x32xbf16> to vector<1x8x32xbf16>
    %80 = vector.shape_cast %79 : vector<1x8x32xbf16> to vector<8x32xbf16>
    %cst_32 = arith.constant dense<0.000000e+00> : vector<16x32xf32>
    %81 = tpu.matmul %78, %80, %cst_32 {dimension_numbers = #tpu.dot_dimension_numbers<[1], [0], [0], [1], [0, 0, 1, 1], [], []>} : vector<16x8xbf16>, vector<8x32xbf16>, vector<16x32xf32> -> vector<16x32xf32>
    %82 = arith.addf %74, %81 : vector<16x32xf32>
    %83 = vector.extract_strided_slice %71 {offsets = [0, 1, 0, 0], sizes = [2, 1, 8, 8], strides = [1, 1, 1, 1]} : vector<2x4x8x8xf32> to vector<2x1x8x8xf32>
    %84 = vector.shape_cast %83 : vector<2x1x8x8xf32> to vector<2x8x8xf32>
    %85 = vector.shape_cast %84 : vector<2x8x8xf32> to vector<16x8xf32>
    %86 = arith.truncf %85 : vector<16x8xf32> to vector<16x8xbf16>
    %87 = vector.extract_strided_slice %73 {offsets = [1, 0, 0], sizes = [1, 8, 32], strides = [1, 1, 1]} : vector<4x8x32xbf16> to vector<1x8x32xbf16>
    %88 = vector.shape_cast %87 : vector<1x8x32xbf16> to vector<8x32xbf16>
    %cst_33 = arith.constant dense<0.000000e+00> : vector<16x32xf32>
    %89 = tpu.matmul %86, %88, %cst_33 {dimension_numbers = #tpu.dot_dimension_numbers<[1], [0], [0], [1], [0, 0, 1, 1], [], []>} : vector<16x8xbf16>, vector<8x32xbf16>, vector<16x32xf32> -> vector<16x32xf32>
    %90 = arith.addf %82, %89 : vector<16x32xf32>
    %91 = vector.extract_strided_slice %71 {offsets = [0, 2, 0, 0], sizes = [2, 1, 8, 8], strides = [1, 1, 1, 1]} : vector<2x4x8x8xf32> to vector<2x1x8x8xf32>
    %92 = vector.shape_cast %91 : vector<2x1x8x8xf32> to vector<2x8x8xf32>
    %93 = vector.shape_cast %92 : vector<2x8x8xf32> to vector<16x8xf32>
    %94 = arith.truncf %93 : vector<16x8xf32> to vector<16x8xbf16>
    %95 = vector.extract_strided_slice %73 {offsets = [2, 0, 0], sizes = [1, 8, 32], strides = [1, 1, 1]} : vector<4x8x32xbf16> to vector<1x8x32xbf16>
    %96 = vector.shape_cast %95 : vector<1x8x32xbf16> to vector<8x32xbf16>
    %cst_34 = arith.constant dense<0.000000e+00> : vector<16x32xf32>
    %97 = tpu.matmul %94, %96, %cst_34 {dimension_numbers = #tpu.dot_dimension_numbers<[1], [0], [0], [1], [0, 0, 1, 1], [], []>} : vector<16x8xbf16>, vector<8x32xbf16>, vector<16x32xf32> -> vector<16x32xf32>
    %98 = arith.addf %90, %97 : vector<16x32xf32>
    %99 = vector.extract_strided_slice %71 {offsets = [0, 3, 0, 0], sizes = [2, 1, 8, 8], strides = [1, 1, 1, 1]} : vector<2x4x8x8xf32> to vector<2x1x8x8xf32>
    %100 = vector.shape_cast %99 : vector<2x1x8x8xf32> to vector<2x8x8xf32>
    %101 = vector.shape_cast %100 : vector<2x8x8xf32> to vector<16x8xf32>
    %102 = arith.truncf %101 : vector<16x8xf32> to vector<16x8xbf16>
    %103 = vector.extract_strided_slice %73 {offsets = [3, 0, 0], sizes = [1, 8, 32], strides = [1, 1, 1]} : vector<4x8x32xbf16> to vector<1x8x32xbf16>
    %104 = vector.shape_cast %103 : vector<1x8x32xbf16> to vector<8x32xbf16>
    %cst_35 = arith.constant dense<0.000000e+00> : vector<16x32xf32>
    %105 = tpu.matmul %102, %104, %cst_35 {dimension_numbers = #tpu.dot_dimension_numbers<[1], [0], [0], [1], [0, 0, 1, 1], [], []>} : vector<16x8xbf16>, vector<8x32xbf16>, vector<16x32xf32> -> vector<16x32xf32>
    %106 = arith.addf %98, %105 : vector<16x32xf32>
    %107 = arith.addf %3, %106 : vector<16x32xf32>
    %c0_36 = arith.constant 0 : index
    %c0_37 = arith.constant 0 : index
    %c0_38 = arith.constant 0 : index
    %108 = vector.load %arg9[%c0_36, %c0_37, %c0_38] : memref<1x1x32xf32, #tpu.memory_space<vmem>>, vector<1x1x32xf32>
    %109 = vector.shape_cast %108 : vector<1x1x32xf32> to vector<1x32xf32>
    %110 = vector.broadcast %109 : vector<1x32xf32> to vector<16x32xf32>
    %111 = arith.addf %107, %110 : vector<16x32xf32>
    %c0_39 = arith.constant 0 : index
    %c0_40 = arith.constant 0 : index
    %c0_41 = arith.constant 0 : index
    %112 = vector.load %arg10[%c0_39, %c0_40, %c0_41] : memref<1x1x32xf32, #tpu.memory_space<vmem>>, vector<1x1x32xf32>
    %113 = vector.shape_cast %112 : vector<1x1x32xf32> to vector<1x32xf32>
    %c0_42 = arith.constant 0 : index
    %c0_43 = arith.constant 0 : index
    %c0_44 = arith.constant 0 : index
    %114 = vector.load %arg11[%c0_42, %c0_43, %c0_44] : memref<1x1x32xf32, #tpu.memory_space<vmem>>, vector<1x1x32xf32>
    %115 = vector.shape_cast %114 : vector<1x1x32xf32> to vector<1x32xf32>
    %cst_45 = arith.constant dense<0.000000e+00> : vector<16xf32>
    %116 = vector.multi_reduction <add>, %111, %cst_45 [1] : vector<16x32xf32> to vector<16xf32>
    %117 = vector.shape_cast %116 : vector<16xf32> to vector<16x1xf32>
    %cst_46 = arith.constant 3.200000e+01 : f32
    %118 = vector.broadcast %cst_46 : f32 to vector<16x1xf32>
    %119 = arith.divf %117, %118 : vector<16x1xf32>
    %120 = vector.broadcast %119 : vector<16x1xf32> to vector<16x32xf32>
    %121 = arith.subf %111, %120 : vector<16x32xf32>
    %122 = arith.mulf %121, %121 : vector<16x32xf32>
    %cst_47 = arith.constant dense<0.000000e+00> : vector<16xf32>
    %123 = vector.multi_reduction <add>, %122, %cst_47 [1] : vector<16x32xf32> to vector<16xf32>
    %124 = vector.shape_cast %123 : vector<16xf32> to vector<16x1xf32>
    %cst_48 = arith.constant 3.200000e+01 : f32
    %125 = vector.broadcast %cst_48 : f32 to vector<16x1xf32>
    %126 = arith.divf %124, %125 : vector<16x1xf32>
    %127 = vector.broadcast %119 : vector<16x1xf32> to vector<16x32xf32>
    %128 = arith.subf %111, %127 : vector<16x32xf32>
    %cst_49 = arith.constant 9.99999974E-6 : f32
    %129 = vector.broadcast %cst_49 : f32 to vector<16x1xf32>
    %130 = arith.addf %126, %129 : vector<16x1xf32>
    %131 = math.rsqrt %130 : vector<16x1xf32>
    %132 = vector.broadcast %131 : vector<16x1xf32> to vector<16x32xf32>
    %133 = arith.mulf %128, %132 : vector<16x32xf32>
    %134 = vector.broadcast %113 : vector<1x32xf32> to vector<16x32xf32>
    %135 = arith.mulf %133, %134 : vector<16x32xf32>
    %136 = vector.broadcast %115 : vector<1x32xf32> to vector<16x32xf32>
    %137 = arith.addf %135, %136 : vector<16x32xf32>
    %138 = arith.truncf %137 : vector<16x32xf32> to vector<16x32xbf16>
    %c0_50 = arith.constant 0 : index
    %c0_51 = arith.constant 0 : index
    %c0_52 = arith.constant 0 : index
    %139 = vector.load %arg12[%c0_50, %c0_51, %c0_52] : memref<1x32x64xbf16, #tpu.memory_space<vmem>>, vector<1x32x64xbf16>
    %140 = vector.shape_cast %139 : vector<1x32x64xbf16> to vector<32x64xbf16>
    %cst_53 = arith.constant dense<0.000000e+00> : vector<16x64xf32>
    %141 = tpu.matmul %138, %140, %cst_53 {dimension_numbers = #tpu.dot_dimension_numbers<[1], [0], [0], [1], [0, 0, 1, 1], [], []>} : vector<16x32xbf16>, vector<32x64xbf16>, vector<16x64xf32> -> vector<16x64xf32>
    %c0_54 = arith.constant 0 : index
    %c0_55 = arith.constant 0 : index
    %c0_56 = arith.constant 0 : index
    %142 = vector.load %arg13[%c0_54, %c0_55, %c0_56] : memref<1x1x64xf32, #tpu.memory_space<vmem>>, vector<1x1x64xf32>
    %143 = vector.shape_cast %142 : vector<1x1x64xf32> to vector<1x64xf32>
    %144 = vector.broadcast %143 : vector<1x64xf32> to vector<16x64xf32>
    %145 = arith.addf %141, %144 : vector<16x64xf32>
    %cst_57 = arith.constant 5.000000e-01 : f32
    %146 = vector.broadcast %cst_57 : f32 to vector<16x64xf32>
    %147 = arith.mulf %146, %145 : vector<16x64xf32>
    %cst_58 = arith.constant 0.707106769 : f32
    %148 = vector.broadcast %cst_58 : f32 to vector<16x64xf32>
    %149 = arith.mulf %145, %148 : vector<16x64xf32>
    %150 = math.erf %149 : vector<16x64xf32>
    %cst_59 = arith.constant 1.000000e+00 : f32
    %151 = vector.broadcast %cst_59 : f32 to vector<16x64xf32>
    %152 = arith.addf %151, %150 : vector<16x64xf32>
    %153 = arith.mulf %147, %152 : vector<16x64xf32>
    %154 = arith.truncf %153 : vector<16x64xf32> to vector<16x64xbf16>
    %c0_60 = arith.constant 0 : index
    %c0_61 = arith.constant 0 : index
    %c0_62 = arith.constant 0 : index
    %155 = vector.load %arg14[%c0_60, %c0_61, %c0_62] : memref<1x64x32xbf16, #tpu.memory_space<vmem>>, vector<1x64x32xbf16>
    %156 = vector.shape_cast %155 : vector<1x64x32xbf16> to vector<64x32xbf16>
    %cst_63 = arith.constant dense<0.000000e+00> : vector<16x32xf32>
    %157 = tpu.matmul %154, %156, %cst_63 {dimension_numbers = #tpu.dot_dimension_numbers<[1], [0], [0], [1], [0, 0, 1, 1], [], []>} : vector<16x64xbf16>, vector<64x32xbf16>, vector<16x32xf32> -> vector<16x32xf32>
    %158 = arith.addf %111, %157 : vector<16x32xf32>
    %c0_64 = arith.constant 0 : index
    %c0_65 = arith.constant 0 : index
    %c0_66 = arith.constant 0 : index
    %159 = vector.load %arg15[%c0_64, %c0_65, %c0_66] : memref<1x1x32xf32, #tpu.memory_space<vmem>>, vector<1x1x32xf32>
    %160 = vector.shape_cast %159 : vector<1x1x32xf32> to vector<1x32xf32>
    %161 = vector.broadcast %160 : vector<1x32xf32> to vector<16x32xf32>
    %162 = arith.addf %158, %161 : vector<16x32xf32>
    %c0_67 = arith.constant 0 : index
    %c0_68 = arith.constant 0 : index
    %163 = vector.load %arg21[%c0_67, %c0_68] : memref<16x32xf32, #tpu.memory_space<vmem>>, vector<16x32xf32>
    tpu.vector_store %arg21[%c0_67, %c0_68], %162 {strides = array<i32>} : memref<16x32xf32, #tpu.memory_space<vmem>>, vector<16x32xf32>,
    %c1_i32 = arith.constant 1 : i32
    %164 = arith.cmpi eq, %arg1, %c1_i32 : i32
    %165 = arith.extui %164 : i1 to i32
    %c0_i32_69 = arith.constant 0 : i32
    %166 = arith.cmpi ne, %165, %c0_i32_69 : i32
    scf.if %166 {
      %c0_70 = arith.constant 0 : index
      %c0_71 = arith.constant 0 : index
      %167 = vector.load %arg16[%c0_70, %c0_71] : memref<1x32xf32, #tpu.memory_space<vmem>>, vector<1x32xf32>
      %c0_72 = arith.constant 0 : index
      %c0_73 = arith.constant 0 : index
      %168 = vector.load %arg17[%c0_72, %c0_73] : memref<1x32xf32, #tpu.memory_space<vmem>>, vector<1x32xf32>
      %cst_74 = arith.constant dense<0.000000e+00> : vector<16xf32>
      %169 = vector.multi_reduction <add>, %162, %cst_74 [1] : vector<16x32xf32> to vector<16xf32>
      %170 = vector.shape_cast %169 : vector<16xf32> to vector<16x1xf32>
      %cst_75 = arith.constant 3.200000e+01 : f32
      %171 = vector.broadcast %cst_75 : f32 to vector<16x1xf32>
      %172 = arith.divf %170, %171 : vector<16x1xf32>
      %173 = vector.broadcast %172 : vector<16x1xf32> to vector<16x32xf32>
      %174 = arith.subf %162, %173 : vector<16x32xf32>
      %175 = arith.mulf %174, %174 : vector<16x32xf32>
      %cst_76 = arith.constant dense<0.000000e+00> : vector<16xf32>
      %176 = vector.multi_reduction <add>, %175, %cst_76 [1] : vector<16x32xf32> to vector<16xf32>
      %177 = vector.shape_cast %176 : vector<16xf32> to vector<16x1xf32>
      %cst_77 = arith.constant 3.200000e+01 : f32
      %178 = vector.broadcast %cst_77 : f32 to vector<16x1xf32>
      %179 = arith.divf %177, %178 : vector<16x1xf32>
      %180 = vector.broadcast %172 : vector<16x1xf32> to vector<16x32xf32>
      %181 = arith.subf %162, %180 : vector<16x32xf32>
      %cst_78 = arith.constant 9.99999974E-6 : f32
      %182 = vector.broadcast %cst_78 : f32 to vector<16x1xf32>
      %183 = arith.addf %179, %182 : vector<16x1xf32>
      %184 = math.rsqrt %183 : vector<16x1xf32>
      %185 = vector.broadcast %184 : vector<16x1xf32> to vector<16x32xf32>
      %186 = arith.mulf %181, %185 : vector<16x32xf32>
      %187 = vector.broadcast %167 : vector<1x32xf32> to vector<16x32xf32>
      %188 = arith.mulf %186, %187 : vector<16x32xf32>
      %189 = vector.broadcast %168 : vector<1x32xf32> to vector<16x32xf32>
      %190 = arith.addf %188, %189 : vector<16x32xf32>
      %191 = vector.shape_cast %190 : vector<16x32xf32> to vector<2x8x32xf32>
      %cst_79 = arith.constant dense<0.000000e+00> : vector<2x32xf32>
      %192 = vector.multi_reduction <add>, %191, %cst_79 [1] : vector<2x8x32xf32> to vector<2x32xf32>
      %cst_80 = arith.constant 8.000000e+00 : f32
      %193 = vector.broadcast %cst_80 : f32 to vector<2x32xf32>
      %194 = arith.divf %192, %193 : vector<2x32xf32>
      %195 = arith.truncf %194 : vector<2x32xf32> to vector<2x32xbf16>
      %c0_81 = arith.constant 0 : index
      %c0_82 = arith.constant 0 : index
      %196 = vector.load %arg18[%c0_81, %c0_82] : memref<32x7xbf16, #tpu.memory_space<vmem>>, vector<32x7xbf16>
      %cst_83 = arith.constant dense<0.000000e+00> : vector<2x7xf32>
      %197 = tpu.matmul %195, %196, %cst_83 {dimension_numbers = #tpu.dot_dimension_numbers<[1], [0], [0], [1], [0, 0, 1, 1], [], []>} : vector<2x32xbf16>, vector<32x7xbf16>, vector<2x7xf32> -> vector<2x7xf32>
      %c0_84 = arith.constant 0 : index
      %c0_85 = arith.constant 0 : index
      %198 = vector.load %arg19[%c0_84, %c0_85] : memref<1x7xf32, #tpu.memory_space<vmem>>, vector<1x7xf32>
      %199 = vector.broadcast %198 : vector<1x7xf32> to vector<2x7xf32>
      %200 = arith.addf %197, %199 : vector<2x7xf32>
      %201 = arith.negf %200 : vector<2x7xf32>
      %202 = math.exp %201 : vector<2x7xf32>
      %cst_86 = arith.constant 1.000000e+00 : f32
      %203 = vector.broadcast %cst_86 : f32 to vector<2x7xf32>
      %204 = arith.addf %203, %202 : vector<2x7xf32>
      %205 = arith.divf %203, %204 : vector<2x7xf32>
      %c0_87 = arith.constant 0 : index
      %c0_88 = arith.constant 0 : index
      %206 = vector.load %arg20[%c0_87, %c0_88] : memref<2x7xf32, #tpu.memory_space<vmem>>, vector<2x7xf32>
      tpu.vector_store %arg20[%c0_87, %c0_88], %205 {strides = array<i32>} : memref<2x7xf32, #tpu.memory_space<vmem>>, vector<2x7xf32>,
    } else {
    }
    return
  }
  func.func @transform_0(%arg0: i32, %arg1: i32) -> (i32, i32, i32) {
    %c0_i32 = arith.constant 0 : i32
    %c0_i32_0 = arith.constant 0 : i32
    %c0_i32_1 = arith.constant 0 : i32
    return %arg0, %c0_i32, %c0_i32_0 : i32, i32, i32
  }
  func.func @transform_1(%arg0: i32, %arg1: i32) -> (i32, i32, i32, i32) {
    %c0_i32 = arith.constant 0 : i32
    %c0_i32_0 = arith.constant 0 : i32
    %c0_i32_1 = arith.constant 0 : i32
    %c0_i32_2 = arith.constant 0 : i32
    return %arg0, %c0_i32, %c0_i32_0, %c0_i32_1 : i32, i32, i32, i32
  }
  func.func @transform_2(%arg0: i32, %arg1: i32) -> (i32, i32, i32) {
    %c0_i32 = arith.constant 0 : i32
    %c0_i32_0 = arith.constant 0 : i32
    %c0_i32_1 = arith.constant 0 : i32
    return %arg1, %c0_i32, %c0_i32_0 : i32, i32, i32
  }
  func.func @transform_3(%arg0: i32, %arg1: i32) -> (i32, i32, i32) {
    %c0_i32 = arith.constant 0 : i32
    %c0_i32_0 = arith.constant 0 : i32
    %c0_i32_1 = arith.constant 0 : i32
    return %arg1, %c0_i32, %c0_i32_0 : i32, i32, i32
  }
  func.func @transform_4(%arg0: i32, %arg1: i32) -> (i32, i32, i32) {
    %c0_i32 = arith.constant 0 : i32
    %c0_i32_0 = arith.constant 0 : i32
    %c0_i32_1 = arith.constant 0 : i32
    return %arg1, %c0_i32, %c0_i32_0 : i32, i32, i32
  }
  func.func @transform_5(%arg0: i32, %arg1: i32) -> (i32, i32, i32) {
    %c0_i32 = arith.constant 0 : i32
    %c0_i32_0 = arith.constant 0 : i32
    %c0_i32_1 = arith.constant 0 : i32
    return %arg1, %c0_i32, %c0_i32_0 : i32, i32, i32
  }
  func.func @transform_6(%arg0: i32, %arg1: i32) -> (i32, i32, i32, i32) {
    %c0_i32 = arith.constant 0 : i32
    %c0_i32_0 = arith.constant 0 : i32
    %c0_i32_1 = arith.constant 0 : i32
    %c0_i32_2 = arith.constant 0 : i32
    return %arg1, %c0_i32, %c0_i32_0, %c0_i32_1 : i32, i32, i32, i32
  }
  func.func @transform_7(%arg0: i32, %arg1: i32) -> (i32, i32, i32) {
    %c0_i32 = arith.constant 0 : i32
    %c0_i32_0 = arith.constant 0 : i32
    %c0_i32_1 = arith.constant 0 : i32
    return %arg1, %c0_i32, %c0_i32_0 : i32, i32, i32
  }
  func.func @transform_8(%arg0: i32, %arg1: i32) -> (i32, i32, i32) {
    %c0_i32 = arith.constant 0 : i32
    %c0_i32_0 = arith.constant 0 : i32
    %c0_i32_1 = arith.constant 0 : i32
    return %arg1, %c0_i32, %c0_i32_0 : i32, i32, i32
  }
  func.func @transform_9(%arg0: i32, %arg1: i32) -> (i32, i32, i32) {
    %c0_i32 = arith.constant 0 : i32
    %c0_i32_0 = arith.constant 0 : i32
    %c0_i32_1 = arith.constant 0 : i32
    return %arg1, %c0_i32, %c0_i32_0 : i32, i32, i32
  }
  func.func @transform_10(%arg0: i32, %arg1: i32) -> (i32, i32, i32) {
    %c0_i32 = arith.constant 0 : i32
    %c0_i32_0 = arith.constant 0 : i32
    %c0_i32_1 = arith.constant 0 : i32
    return %arg1, %c0_i32, %c0_i32_0 : i32, i32, i32
  }
  func.func @transform_11(%arg0: i32, %arg1: i32) -> (i32, i32, i32) {
    %c0_i32 = arith.constant 0 : i32
    %c0_i32_0 = arith.constant 0 : i32
    %c0_i32_1 = arith.constant 0 : i32
    return %arg1, %c0_i32, %c0_i32_0 : i32, i32, i32
  }
  func.func @transform_12(%arg0: i32, %arg1: i32) -> (i32, i32, i32) {
    %c0_i32 = arith.constant 0 : i32
    %c0_i32_0 = arith.constant 0 : i32
    %c0_i32_1 = arith.constant 0 : i32
    return %arg1, %c0_i32, %c0_i32_0 : i32, i32, i32
  }
  func.func @transform_13(%arg0: i32, %arg1: i32) -> (i32, i32, i32) {
    %c0_i32 = arith.constant 0 : i32
    %c0_i32_0 = arith.constant 0 : i32
    %c0_i32_1 = arith.constant 0 : i32
    return %arg1, %c0_i32, %c0_i32_0 : i32, i32, i32
  }
  func.func @transform_14(%arg0: i32, %arg1: i32) -> (i32, i32) {
    %c0_i32 = arith.constant 0 : i32
    %c0_i32_0 = arith.constant 0 : i32
    %c0_i32_1 = arith.constant 0 : i32
    return %c0_i32, %c0_i32_0 : i32, i32
  }
  func.func @transform_15(%arg0: i32, %arg1: i32) -> (i32, i32) {
    %c0_i32 = arith.constant 0 : i32
    %c0_i32_0 = arith.constant 0 : i32
    %c0_i32_1 = arith.constant 0 : i32
    return %c0_i32, %c0_i32_0 : i32, i32
  }
  func.func @transform_16(%arg0: i32, %arg1: i32) -> (i32, i32) {
    %c0_i32 = arith.constant 0 : i32
    %c0_i32_0 = arith.constant 0 : i32
    %c0_i32_1 = arith.constant 0 : i32
    return %c0_i32, %c0_i32_0 : i32, i32
  }
  func.func @transform_17(%arg0: i32, %arg1: i32) -> (i32, i32) {
    %c0_i32 = arith.constant 0 : i32
    %c0_i32_0 = arith.constant 0 : i32
    %c0_i32_1 = arith.constant 0 : i32
    return %c0_i32, %c0_i32_0 : i32, i32
  }
  func.func @transform_18(%arg0: i32, %arg1: i32) -> (i32, i32) {
    %c0_i32 = arith.constant 0 : i32
    %c0_i32_0 = arith.constant 0 : i32
    return %arg0, %c0_i32 : i32, i32
  }
}

</mosaic_0001>

<llo_original>
// kernel: tpu_custom_call.1
$region0: #{tpu_custom_call.1}
  #allocation0 [shape = 'u32[]', space=smem, size = 0x4, offset = 0x4, fixed_abs, tag = 'smem constant byte address 0x4 - core index']
  #allocation1 [shape = 'u32[144,128]{1,0:T(1,128)}', space=vmem, size = 0x12000, scoped, tag = 'internal scratch']
  #allocation2 [shape = 'f32[16,32]{1,0:T(8,128)}', space=vmem, size = 0x2000, scoped, tag = 'scratch operand']
  %s0 = inlined_call_operand.vmem [shape: f32[2,8,32], index: 0, kind: input, shape index: {}]
  %s1 = inlined_call_operand.vmem [shape: f32[2,1,1,8], index: 1, kind: input, shape index: {}]
  %s2 = inlined_call_operand.vmem [shape: f32[2,1,32], index: 2, kind: input, shape index: {}]
  %s3 = inlined_call_operand.vmem [shape: f32[2,1,32], index: 3, kind: input, shape index: {}]
  %s4 = inlined_call_operand.vmem [shape: bf16[2,32,96], index: 4, kind: input, shape index: {}]
  %s5 = inlined_call_operand.vmem [shape: f32[2,1,96], index: 5, kind: input, shape index: {}]
  %s6 = inlined_call_operand.vmem [shape: bf16[2,4,8,32], index: 6, kind: input, shape index: {}]
  %s7 = inlined_call_operand.vmem [shape: f32[2,1,32], index: 7, kind: input, shape index: {}]
  %s8 = inlined_call_operand.vmem [shape: f32[2,1,32], index: 8, kind: input, shape index: {}]
  %s9 = inlined_call_operand.hbm [shape: f32[2,1,32], index: 9, kind: input, shape index: {}]
  %s10 = inlined_call_operand.vmem [shape: bf16[2,32,64], index: 10, kind: input, shape index: {}]
  %s11 = inlined_call_operand.hbm [shape: f32[2,1,64], index: 11, kind: input, shape index: {}]
  %s12 = inlined_call_operand.vmem [shape: bf16[2,64,32], index: 12, kind: input, shape index: {}]
  %s13 = inlined_call_operand.vmem [shape: f32[2,1,32], index: 13, kind: input, shape index: {}]
  %s14 = inlined_call_operand.vmem [shape: f32[1,32], index: 14, kind: input, shape index: {}]
  %s15 = inlined_call_operand.vmem [shape: f32[1,32], index: 15, kind: input, shape index: {}]
  %s16 = inlined_call_operand.vmem [shape: bf16[32,7], index: 16, kind: input, shape index: {}]
  %s17 = inlined_call_operand.vmem [shape: f32[1,7], index: 17, kind: input, shape index: {}]
  %s18 = inlined_call_operand.hbm [shape: f32[2,7], index: 18, kind: output, shape index: {}]
  %s19 = sld [smem:[#allocation0]]
  $region121: #{tpu_custom_call.1} parent=0
    _
  %s21 = ssub.s32 1, %s19
  %s22 = scalar_select 0, %s21, %s19
  $region1: #{tpu_custom_call.1} parent=0
    #allocation3 [shape = 'u8[1024]{0}', space=vmem, size = 0x400, scoped, tag = 'input window, operand 9']
    #allocation4 [shape = 's32[2]{0}', space=sflag, size = 0x8, scoped, tag = 'scoped memory for tpu_custom_call.1']
    #allocation5 [shape = 's32[2]{0}', space=sflag, size = 0x8, scoped, tag = 'scoped memory for tpu_custom_call.1']
    #allocation6 [shape = 'u8[1024]{0}', space=vmem, size = 0x400, scoped, tag = 'input window, operand 11']
    #allocation7 [shape = 's32[2]{0}', space=sflag, size = 0x8, scoped, tag = 'scoped memory for tpu_custom_call.1']
    #allocation8 [shape = 'u8[1024]{0}', space=vmem, size = 0x400, scoped, tag = 'output window, operand 0, single buffered']
    %23 = vsyncpa [#allocation4], 0
    %s24 = scalar_lea.sflag [#allocation4], 1
    %25 = vsyncpa %s24, 0
    %26 = vsyncpa [#allocation7], 0
    %s27 = scalar_lea.sflag [#allocation7], 1
    %28 = vsyncpa %s27, 0
    %29 = vsyncpa [#allocation5], 0
    loop: start=0, step=1, limit=4
    $region2: #{tpu_custom_call.1} parent=1 // loop_pre_header
      _
    $region3: #{tpu_custom_call.1} parent=1 // loop_header
      %s31 = sphi 0, %s35
      %p32 = scmp.ge.s32.totalorder %s31, 4
      %s38 = sphi 0, %s50
      %s39 = sphi 0, %s46
      %s40 = sphi 0, %s38
      %s41 = sphi 0, %s39
      %s42 = sphi 0, %s40
      %s43 = sphi 0, %s41
      %s53 = sphi 0, %s55
      %s56 = sphi 0, %s53
      %s57 = sphi 0, %s56
      %s73 = sphi 0, %s57
      %s79 = sphi 0, %s81
      %s82 = sphi 0, %s79
      %s83 = sphi 0, %s82
      %s99 = sphi 0, %s83
      %s105 = sphi 0, %s107
      %s108 = sphi 0, %s105
      %s109 = sphi 0, %s108
      %s125 = sphi 0, %s109
      %s131 = sphi 0, %s133
      %s134 = sphi 0, %s131
      %s135 = sphi 0, %s134
      %s151 = sphi 0, %s135
      %s157 = sphi 0, %s159
      %s160 = sphi 0, %s157
      %s161 = sphi 0, %s160
      %s177 = sphi 0, %s161
      %s183 = sphi 0, %s185
      %s186 = sphi 0, %s183
      %s187 = sphi 0, %s186
      %s203 = sphi 0, %s187
      %s209 = sphi 0, %s211
      %s212 = sphi 0, %s209
      %s213 = sphi 0, %s212
      %s229 = sphi 0, %s213
      %s235 = sphi 0, %s237
      %s238 = sphi 0, %s235
      %s239 = sphi 0, %s238
      %s255 = sphi 0, %s239
      %s261 = sphi 0, %s263
      %s264 = sphi 0, %s261
      %s265 = sphi 0, %s264
      %s281 = sphi 0, %s265
      %s287 = sphi 0, %s289
      %s290 = sphi 0, %s287
      %s291 = sphi 0, %s290
      %s307 = sphi 0, %s291
      %s313 = sphi 0, %s315
      %s316 = sphi 0, %s313
      %s317 = sphi 0, %s316
      %s333 = sphi 0, %s317
      %s339 = sphi 0, %s341
      %s342 = sphi 0, %s339
      %s343 = sphi 0, %s342
      %s359 = sphi 0, %s343
      %s365 = sphi 0, %s367
      %s368 = sphi 0, %s365
      %s369 = sphi 0, %s368
      %s385 = sphi 0, %s369
      %s391 = sphi 0, %s393
      %s394 = sphi 0, %s391
      %s395 = sphi 0, %s394
      %s411 = sphi 0, %s395
      %s415 = sphi 0, %s415
      %s417 = sphi 0, %s415
      %s418 = sphi 0, %s417
      %s432 = sphi 0, %s418
      %s436 = sphi 0, %s436
      %s438 = sphi 0, %s436
      %s439 = sphi 0, %s438
      %s453 = sphi 0, %s439
      %s457 = sphi 0, %s457
      %s459 = sphi 0, %s457
      %s460 = sphi 0, %s459
      %s474 = sphi 0, %s460
      %s478 = sphi 0, %s478
      %s480 = sphi 0, %s478
      %s481 = sphi 0, %s480
      %s495 = sphi 0, %s481
      %s501 = sphi 0, %s503
      %s504 = sphi 0, %s501
      %s505 = sphi 0, %s504
      %s521 = sphi 0, %s505
    $region4: #{tpu_custom_call.1} parent=1 // loop_header_branch
      %34 = sbr.rel (%p32) target = $region8
    $region5: #{tpu_custom_call.1} parent=1 // loop_body
      %s36 = ssub.s32 %s31, 1
      %s37 = ssub.s32 %s31, 2
      %s44 = sadd.s32 1, %s39
      %p45 = scmp.ge.s32.totalorder %s44, 2
      %s46 = scalar_select %p45, 0, %s44
      %s47 = sadd.s32 1, %s38
      %s48 = scalar_select %p45, %s47, %s38
      %p49 = scmp.ge.s32.totalorder %s48, 1
      %s50 = scalar_select %p49, 0, %s48
      %s51 = ssub.s32 %s38, %s50
      %p52 = scmp.eq.s32.totalorder %s51, 0
      %s54 = sadd.s32 %s53, 1
      %s55 = scalar_select %p52, %s53, %s54
      %p58 = pneg %p52
      %p59 = scmp.eq.s32.totalorder %s31, 1
      %p60 = por %p58, %p59
      %p61 = scmp.ne.s32.totalorder %s53, %s56
      %p62 = scmp.eq.s32.totalorder %s31, 0
      %p63 = por %p61, %p62
      %p64 = scmp.ne.s32.totalorder %s53, %s56
      %p65 = scmp.eq.s32.totalorder %s36, 1
      %p66 = por %p64, %p65
      %p67 = scmp.ne.s32.totalorder %s56, %s57
      %p68 = scmp.eq.s32.totalorder %s36, 0
      %p69 = por %p67, %p68
      %p70 = scmp.ne.s32.totalorder %s56, %s57
      %p71 = scmp.eq.s32.totalorder %s37, 1
      %p72 = por %p70, %p71
      %p74 = scmp.ne.s32.totalorder %s57, %s73
      %p75 = scmp.eq.s32.totalorder %s37, 0
      %p76 = por %p74, %p75
      %s77 = ssub.s32 %s38, %s50
      %p78 = scmp.eq.s32.totalorder %s77, 0
      %s80 = sadd.s32 %s79, 1
      %s81 = scalar_select %p78, %s79, %s80
      %p84 = pneg %p78
      %p85 = scmp.eq.s32.totalorder %s31, 1
      %p86 = por %p84, %p85
      %p87 = scmp.ne.s32.totalorder %s79, %s82
      %p88 = scmp.eq.s32.totalorder %s31, 0
      %p89 = por %p87, %p88
      %p90 = scmp.ne.s32.totalorder %s79, %s82
      %p91 = scmp.eq.s32.totalorder %s36, 1
      %p92 = por %p90, %p91
      %p93 = scmp.ne.s32.totalorder %s82, %s83
      %p94 = scmp.eq.s32.totalorder %s36, 0
      %p95 = por %p93, %p94
      %p96 = scmp.ne.s32.totalorder %s82, %s83
      %p97 = scmp.eq.s32.totalorder %s37, 1
      %p98 = por %p96, %p97
      %p100 = scmp.ne.s32.totalorder %s83, %s99
      %p101 = scmp.eq.s32.totalorder %s37, 0
      %p102 = por %p100, %p101
      %s103 = ssub.s32 %s39, %s46
      %p104 = scmp.eq.s32.totalorder %s103, 0
      %s106 = sadd.s32 %s105, 1
      %s107 = scalar_select %p104, %s105, %s106
      %p110 = pneg %p104
      %p111 = scmp.eq.s32.totalorder %s31, 1
      %p112 = por %p110, %p111
      %p113 = scmp.ne.s32.totalorder %s105, %s108
      %p114 = scmp.eq.s32.totalorder %s31, 0
      %p115 = por %p113, %p114
      %p116 = scmp.ne.s32.totalorder %s105, %s108
      %p117 = scmp.eq.s32.totalorder %s36, 1
      %p118 = por %p116, %p117
      %p119 = scmp.ne.s32.totalorder %s108, %s109
      %p120 = scmp.eq.s32.totalorder %s36, 0
      %p121 = por %p119, %p120
      %p122 = scmp.ne.s32.totalorder %s108, %s109
      %p123 = scmp.eq.s32.totalorder %s37, 1
      %p124 = por %p122, %p123
      %p126 = scmp.ne.s32.totalorder %s109, %s125
      %p127 = scmp.eq.s32.totalorder %s37, 0
      %p128 = por %p126, %p127
      %s129 = ssub.s32 %s39, %s46
      %p130 = scmp.eq.s32.totalorder %s129, 0
      %s132 = sadd.s32 %s131, 1
      %s133 = scalar_select %p130, %s131, %s132
      %p136 = pneg %p130
      %p137 = scmp.eq.s32.totalorder %s31, 1
      %p138 = por %p136, %p137
      %p139 = scmp.ne.s32.totalorder %s131, %s134
      %p140 = scmp.eq.s32.totalorder %s31, 0
      %p141 = por %p139, %p140
      %p142 = scmp.ne.s32.totalorder %s131, %s134
      %p143 = scmp.eq.s32.totalorder %s36, 1
      %p144 = por %p142, %p143
      %p145 = scmp.ne.s32.totalorder %s134, %s135
      %p146 = scmp.eq.s32.totalorder %s36, 0
      %p147 = por %p145, %p146
      %p148 = scmp.ne.s32.totalorder %s134, %s135
      %p149 = scmp.eq.s32.totalorder %s37, 1
      %p150 = por %p148, %p149
      %p152 = scmp.ne.s32.totalorder %s135, %s151
      %p153 = scmp.eq.s32.totalorder %s37, 0
      %p154 = por %p152, %p153
      %s155 = ssub.s32 %s39, %s46
      %p156 = scmp.eq.s32.totalorder %s155, 0
      %s158 = sadd.s32 %s157, 1
      %s159 = scalar_select %p156, %s157, %s158
      %p162 = pneg %p156
      %p163 = scmp.eq.s32.totalorder %s31, 1
      %p164 = por %p162, %p163
      %p165 = scmp.ne.s32.totalorder %s157, %s160
      %p166 = scmp.eq.s32.totalorder %s31, 0
      %p167 = por %p165, %p166
      %p168 = scmp.ne.s32.totalorder %s157, %s160
      %p169 = scmp.eq.s32.totalorder %s36, 1
      %p170 = por %p168, %p169
      %p171 = scmp.ne.s32.totalorder %s160, %s161
      %p172 = scmp.eq.s32.totalorder %s36, 0
      %p173 = por %p171, %p172
      %p174 = scmp.ne.s32.totalorder %s160, %s161
      %p175 = scmp.eq.s32.totalorder %s37, 1
      %p176 = por %p174, %p175
      %p178 = scmp.ne.s32.totalorder %s161, %s177
      %p179 = scmp.eq.s32.totalorder %s37, 0
      %p180 = por %p178, %p179
      %s181 = ssub.s32 %s39, %s46
      %p182 = scmp.eq.s32.totalorder %s181, 0
      %s184 = sadd.s32 %s183, 1
      %s185 = scalar_select %p182, %s183, %s184
      %p188 = pneg %p182
      %p189 = scmp.eq.s32.totalorder %s31, 1
      %p190 = por %p188, %p189
      %p191 = scmp.ne.s32.totalorder %s183, %s186
      %p192 = scmp.eq.s32.totalorder %s31, 0
      %p193 = por %p191, %p192
      %p194 = scmp.ne.s32.totalorder %s183, %s186
      %p195 = scmp.eq.s32.totalorder %s36, 1
      %p196 = por %p194, %p195
      %p197 = scmp.ne.s32.totalorder %s186, %s187
      %p198 = scmp.eq.s32.totalorder %s36, 0
      %p199 = por %p197, %p198
      %p200 = scmp.ne.s32.totalorder %s186, %s187
      %p201 = scmp.eq.s32.totalorder %s37, 1
      %p202 = por %p200, %p201
      %p204 = scmp.ne.s32.totalorder %s187, %s203
      %p205 = scmp.eq.s32.totalorder %s37, 0
      %p206 = por %p204, %p205
      %s207 = ssub.s32 %s39, %s46
      %p208 = scmp.eq.s32.totalorder %s207, 0
      %s210 = sadd.s32 %s209, 1
      %s211 = scalar_select %p208, %s209, %s210
      %p214 = pneg %p208
      %p215 = scmp.eq.s32.totalorder %s31, 1
      %p216 = por %p214, %p215
      %p217 = scmp.ne.s32.totalorder %s209, %s212
      %p218 = scmp.eq.s32.totalorder %s31, 0
      %p219 = por %p217, %p218
      %p220 = scmp.ne.s32.totalorder %s209, %s212
      %p221 = scmp.eq.s32.totalorder %s36, 1
      %p222 = por %p220, %p221
      %p223 = scmp.ne.s32.totalorder %s212, %s213
      %p224 = scmp.eq.s32.totalorder %s36, 0
      %p225 = por %p223, %p224
      %p226 = scmp.ne.s32.totalorder %s212, %s213
      %p227 = scmp.eq.s32.totalorder %s37, 1
      %p228 = por %p226, %p227
      %p230 = scmp.ne.s32.totalorder %s213, %s229
      %p231 = scmp.eq.s32.totalorder %s37, 0
      %p232 = por %p230, %p231
      %s233 = ssub.s32 %s39, %s46
      %p234 = scmp.eq.s32.totalorder %s233, 0
      %s236 = sadd.s32 %s235, 1
      %s237 = scalar_select %p234, %s235, %s236
      %p240 = pneg %p234
      %p241 = scmp.eq.s32.totalorder %s31, 1
      %p242 = por %p240, %p241
      %p243 = scmp.ne.s32.totalorder %s235, %s238
      %p244 = scmp.eq.s32.totalorder %s31, 0
      %p245 = por %p243, %p244
      %p246 = scmp.ne.s32.totalorder %s235, %s238
      %p247 = scmp.eq.s32.totalorder %s36, 1
      %p248 = por %p246, %p247
      %p249 = scmp.ne.s32.totalorder %s238, %s239
      %p250 = scmp.eq.s32.totalorder %s36, 0
      %p251 = por %p249, %p250
      %p252 = scmp.ne.s32.totalorder %s238, %s239
      %p253 = scmp.eq.s32.totalorder %s37, 1
      %p254 = por %p252, %p253
      %p256 = scmp.ne.s32.totalorder %s239, %s255
      %p257 = scmp.eq.s32.totalorder %s37, 0
      %p258 = por %p256, %p257
      %s259 = ssub.s32 %s39, %s46
      %p260 = scmp.eq.s32.totalorder %s259, 0
      %s262 = sadd.s32 %s261, 1
      %s263 = scalar_select %p260, %s261, %s262
      %p266 = pneg %p260
      %p267 = scmp.eq.s32.totalorder %s31, 1
      %p268 = por %p266, %p267
      %p269 = scmp.ne.s32.totalorder %s261, %s264
      %p270 = scmp.eq.s32.totalorder %s31, 0
      %p271 = por %p269, %p270
      %p272 = scmp.ne.s32.totalorder %s261, %s264
      %p273 = scmp.eq.s32.totalorder %s36, 1
      %p274 = por %p272, %p273
      %p275 = scmp.ne.s32.totalorder %s264, %s265
      %p276 = scmp.eq.s32.totalorder %s36, 0
      %p277 = por %p275, %p276
      %p278 = scmp.ne.s32.totalorder %s264, %s265
      %p279 = scmp.eq.s32.totalorder %s37, 1
      %p280 = por %p278, %p279
      %p282 = scmp.ne.s32.totalorder %s265, %s281
      %p283 = scmp.eq.s32.totalorder %s37, 0
      %p284 = por %p282, %p283
      %s285 = ssub.s32 %s39, %s46
      %p286 = scmp.eq.s32.totalorder %s285, 0
      %s288 = sadd.s32 %s287, 1
      %s289 = scalar_select %p286, %s287, %s288
      %p292 = pneg %p286
      %p293 = scmp.eq.s32.totalorder %s31, 1
      %p294 = por %p292, %p293
      %p295 = scmp.ne.s32.totalorder %s287, %s290
      %p296 = scmp.eq.s32.totalorder %s31, 0
      %p297 = por %p295, %p296
      %p298 = scmp.ne.s32.totalorder %s287, %s290
      %p299 = scmp.eq.s32.totalorder %s36, 1
      %p300 = por %p298, %p299
      %p301 = scmp.ne.s32.totalorder %s290, %s291
      %p302 = scmp.eq.s32.totalorder %s36, 0
      %p303 = por %p301, %p302
      %p304 = scmp.ne.s32.totalorder %s290, %s291
      %p305 = scmp.eq.s32.totalorder %s37, 1
      %p306 = por %p304, %p305
      %p308 = scmp.ne.s32.totalorder %s291, %s307
      %p309 = scmp.eq.s32.totalorder %s37, 0
      %p310 = por %p308, %p309
      %s311 = ssub.s32 %s39, %s46
      %p312 = scmp.eq.s32.totalorder %s311, 0
      %s314 = sadd.s32 %s313, 1
      %s315 = scalar_select %p312, %s313, %s314
      %p318 = pneg %p312
      %p319 = scmp.eq.s32.totalorder %s31, 1
      %p320 = por %p318, %p319
      %p321 = scmp.ne.s32.totalorder %s313, %s316
      %p322 = scmp.eq.s32.totalorder %s31, 0
      %p323 = por %p321, %p322
      %p324 = scmp.ne.s32.totalorder %s313, %s316
      %p325 = scmp.eq.s32.totalorder %s36, 1
      %p326 = por %p324, %p325
      %p327 = scmp.ne.s32.totalorder %s316, %s317
      %p328 = scmp.eq.s32.totalorder %s36, 0
      %p329 = por %p327, %p328
      %p330 = scmp.ne.s32.totalorder %s316, %s317
      %p331 = scmp.eq.s32.totalorder %s37, 1
      %p332 = por %p330, %p331
      %p334 = scmp.ne.s32.totalorder %s317, %s333
      %p335 = scmp.eq.s32.totalorder %s37, 0
      %p336 = por %p334, %p335
      %s337 = ssub.s32 %s39, %s46
      %p338 = scmp.eq.s32.totalorder %s337, 0
      %s340 = sadd.s32 %s339, 1
      %s341 = scalar_select %p338, %s339, %s340
      %p344 = pneg %p338
      %p345 = scmp.eq.s32.totalorder %s31, 1
      %p346 = por %p344, %p345
      %p347 = scmp.ne.s32.totalorder %s339, %s342
      %p348 = scmp.eq.s32.totalorder %s31, 0
      %p349 = por %p347, %p348
      %p350 = scmp.ne.s32.totalorder %s339, %s342
      %p351 = scmp.eq.s32.totalorder %s36, 1
      %p352 = por %p350, %p351
      %p353 = scmp.ne.s32.totalorder %s342, %s343
      %p354 = scmp.eq.s32.totalorder %s36, 0
      %p355 = por %p353, %p354
      %p356 = scmp.ne.s32.totalorder %s342, %s343
      %p357 = scmp.eq.s32.totalorder %s37, 1
      %p358 = por %p356, %p357
      %p360 = scmp.ne.s32.totalorder %s343, %s359
      %p361 = scmp.eq.s32.totalorder %s37, 0
      %p362 = por %p360, %p361
      %s363 = ssub.s32 %s39, %s46
      %p364 = scmp.eq.s32.totalorder %s363, 0
      %s366 = sadd.s32 %s365, 1
      %s367 = scalar_select %p364, %s365, %s366
      %p370 = pneg %p364
      %p371 = scmp.eq.s32.totalorder %s31, 1
      %p372 = por %p370, %p371
      %p373 = scmp.ne.s32.totalorder %s365, %s368
      %p374 = scmp.eq.s32.totalorder %s31, 0
      %p375 = por %p373, %p374
      %p376 = scmp.ne.s32.totalorder %s365, %s368
      %p377 = scmp.eq.s32.totalorder %s36, 1
      %p378 = por %p376, %p377
      %p379 = scmp.ne.s32.totalorder %s368, %s369
      %p380 = scmp.eq.s32.totalorder %s36, 0
      %p381 = por %p379, %p380
      %p382 = scmp.ne.s32.totalorder %s368, %s369
      %p383 = scmp.eq.s32.totalorder %s37, 1
      %p384 = por %p382, %p383
      %p386 = scmp.ne.s32.totalorder %s369, %s385
      %p387 = scmp.eq.s32.totalorder %s37, 0
      %p388 = por %p386, %p387
      %s389 = ssub.s32 %s39, %s46
      %p390 = scmp.eq.s32.totalorder %s389, 0
      %s392 = sadd.s32 %s391, 1
      %s393 = scalar_select %p390, %s391, %s392
      %p396 = pneg %p390
      %p397 = scmp.eq.s32.totalorder %s31, 1
      %p398 = por %p396, %p397
      %p399 = scmp.ne.s32.totalorder %s391, %s394
      %p400 = scmp.eq.s32.totalorder %s31, 0
      %p401 = por %p399, %p400
      %p402 = scmp.ne.s32.totalorder %s391, %s394
      %p403 = scmp.eq.s32.totalorder %s36, 1
      %p404 = por %p402, %p403
      %p405 = scmp.ne.s32.totalorder %s394, %s395
      %p406 = scmp.eq.s32.totalorder %s36, 0
      %p407 = por %p405, %p406
      %p408 = scmp.ne.s32.totalorder %s394, %s395
      %p409 = scmp.eq.s32.totalorder %s37, 1
      %p410 = por %p408, %p409
      %p412 = scmp.ne.s32.totalorder %s395, %s411
      %p413 = scmp.eq.s32.totalorder %s37, 0
      %p414 = por %p412, %p413
      %s416 = sadd.s32 %s415, 1
      %p419 = scmp.eq.s32.totalorder %s31, 1
      %p420 = scmp.ne.s32.totalorder %s415, %s417
      %p421 = scmp.eq.s32.totalorder %s31, 0
      %p422 = por %p420, %p421
      %p423 = scmp.ne.s32.totalorder %s415, %s417
      %p424 = scmp.eq.s32.totalorder %s36, 1
      %p425 = por %p423, %p424
      %p426 = scmp.ne.s32.totalorder %s417, %s418
      %p427 = scmp.eq.s32.totalorder %s36, 0
      %p428 = por %p426, %p427
      %p429 = scmp.ne.s32.totalorder %s417, %s418
      %p430 = scmp.eq.s32.totalorder %s37, 1
      %p431 = por %p429, %p430
      %p433 = scmp.ne.s32.totalorder %s418, %s432
      %p434 = scmp.eq.s32.totalorder %s37, 0
      %p435 = por %p433, %p434
      %s437 = sadd.s32 %s436, 1
      %p440 = scmp.eq.s32.totalorder %s31, 1
      %p441 = scmp.ne.s32.totalorder %s436, %s438
      %p442 = scmp.eq.s32.totalorder %s31, 0
      %p443 = por %p441, %p442
      %p444 = scmp.ne.s32.totalorder %s436, %s438
      %p445 = scmp.eq.s32.totalorder %s36, 1
      %p446 = por %p444, %p445
      %p447 = scmp.ne.s32.totalorder %s438, %s439
      %p448 = scmp.eq.s32.totalorder %s36, 0
      %p449 = por %p447, %p448
      %p450 = scmp.ne.s32.totalorder %s438, %s439
      %p451 = scmp.eq.s32.totalorder %s37, 1
      %p452 = por %p450, %p451
      %p454 = scmp.ne.s32.totalorder %s439, %s453
      %p455 = scmp.eq.s32.totalorder %s37, 0
      %p456 = por %p454, %p455
      %s458 = sadd.s32 %s457, 1
      %p461 = scmp.eq.s32.totalorder %s31, 1
      %p462 = scmp.ne.s32.totalorder %s457, %s459
      %p463 = scmp.eq.s32.totalorder %s31, 0
      %p464 = por %p462, %p463
      %p465 = scmp.ne.s32.totalorder %s457, %s459
      %p466 = scmp.eq.s32.totalorder %s36, 1
      %p467 = por %p465, %p466
      %p468 = scmp.ne.s32.totalorder %s459, %s460
      %p469 = scmp.eq.s32.totalorder %s36, 0
      %p470 = por %p468, %p469
      %p471 = scmp.ne.s32.totalorder %s459, %s460
      %p472 = scmp.eq.s32.totalorder %s37, 1
      %p473 = por %p471, %p472
      %p475 = scmp.ne.s32.totalorder %s460, %s474
      %p476 = scmp.eq.s32.totalorder %s37, 0
      %p477 = por %p475, %p476
      %s479 = sadd.s32 %s478, 1
      %p482 = scmp.eq.s32.totalorder %s31, 1
      %p483 = scmp.ne.s32.totalorder %s478, %s480
      %p484 = scmp.eq.s32.totalorder %s31, 0
      %p485 = por %p483, %p484
      %p486 = scmp.ne.s32.totalorder %s478, %s480
      %p487 = scmp.eq.s32.totalorder %s36, 1
      %p488 = por %p486, %p487
      %p489 = scmp.ne.s32.totalorder %s480, %s481
      %p490 = scmp.eq.s32.totalorder %s36, 0
      %p491 = por %p489, %p490
      %p492 = scmp.ne.s32.totalorder %s480, %s481
      %p493 = scmp.eq.s32.totalorder %s37, 1
      %p494 = por %p492, %p493
      %p496 = scmp.ne.s32.totalorder %s481, %s495
      %p497 = scmp.eq.s32.totalorder %s37, 0
      %p498 = por %p496, %p497
      %s499 = ssub.s32 %s38, %s50
      %p500 = scmp.eq.s32.totalorder %s499, 0
      %s502 = sadd.s32 %s501, 1
      %s503 = scalar_select %p500, %s501, %s502
      %p506 = pneg %p500
      %p507 = scmp.eq.s32.totalorder %s31, 1
      %p508 = por %p506, %p507
      %p509 = scmp.ne.s32.totalorder %s501, %s504
      %p510 = scmp.eq.s32.totalorder %s31, 0
      %p511 = por %p509, %p510
      %p512 = scmp.ne.s32.totalorder %s501, %s504
      %p513 = scmp.eq.s32.totalorder %s36, 1
      %p514 = por %p512, %p513
      %p515 = scmp.ne.s32.totalorder %s504, %s505
      %p516 = scmp.eq.s32.totalorder %s36, 0
      %p517 = por %p515, %p516
      %p518 = scmp.ne.s32.totalorder %s504, %s505
      %p519 = scmp.eq.s32.totalorder %s37, 1
      %p520 = por %p518, %p519
      %p522 = scmp.ne.s32.totalorder %s505, %s521
      %p523 = scmp.eq.s32.totalorder %s37, 0
      %p524 = por %p522, %p523
      %p525 = scmp.le.s32.totalorder 1, %s31
      %p526 = scmp.lt.s32.totalorder %s31, 3
      %p527 = pnand %p525, %p526
      %p528 = pneg %p527
      // Predicated region
      $region9: #{tpu_custom_call.1} parent=5 // pred_check
        _
      $region10: #{tpu_custom_call.1} parent=5 // pred_check_branch
        %530 = sbr.rel (%p527) target = $region12
      $region11: #{tpu_custom_call.1} parent=5 // pred_region
        %s531 = ssub.s32 %s31, 1
        // Predicated region
        $region13: #{tpu_custom_call.1} parent=11 // pred_check
          %p532 = pneg %p69
        $region14: #{tpu_custom_call.1} parent=11 // pred_check_branch
          %534 = sbr.rel (%p532) target = $region16
        $region15: #{tpu_custom_call.1} parent=11 // pred_region
          %s535 = smul.u32 2, %s40
          %p536 = scmp.lt.s32.totalorder %s535, 1
          %s537 = scalar_select %p536, %s535, 1
          %s538 = smul.addr %s537, 8
          %s539 = scalar_lea.vmem %s0, %s538
          %s540 = smul.u32 2, %s40
        $region16: #{tpu_custom_call.1} parent=11 // pred_fallthru
          _
        // Predicated region
        $region17: #{tpu_custom_call.1} parent=11 // pred_check
          %p541 = pneg %p95
        $region18: #{tpu_custom_call.1} parent=11 // pred_check_branch
          %543 = sbr.rel (%p541) target = $region20
        $region19: #{tpu_custom_call.1} parent=11 // pred_region
          %s544 = smul.u32 2, %s40
          %p545 = scmp.lt.s32.totalorder %s544, 1
          %s546 = scalar_select %p545, %s544, 1
          %s547 = scalar_lea.vmem %s1, %s546
          %s548 = smul.u32 2, %s40
        $region20: #{tpu_custom_call.1} parent=11 // pred_fallthru
          _
        // Predicated region
        $region21: #{tpu_custom_call.1} parent=11 // pred_check
          %p549 = pneg %p428
        $region22: #{tpu_custom_call.1} parent=11 // pred_check_branch
          %551 = sbr.rel (%p549) target = $region24
        $region23: #{tpu_custom_call.1} parent=11 // pred_region
          _
        $region24: #{tpu_custom_call.1} parent=11 // pred_fallthru
          _
        // Predicated region
        $region25: #{tpu_custom_call.1} parent=11 // pred_check
          %p552 = pneg %p449
        $region26: #{tpu_custom_call.1} parent=11 // pred_check_branch
          %554 = sbr.rel (%p552) target = $region28
        $region27: #{tpu_custom_call.1} parent=11 // pred_region
          _
        $region28: #{tpu_custom_call.1} parent=11 // pred_fallthru
          _
        // Predicated region
        $region29: #{tpu_custom_call.1} parent=11 // pred_check
          %p555 = pneg %p470
        $region30: #{tpu_custom_call.1} parent=11 // pred_check_branch
          %557 = sbr.rel (%p555) target = $region32
        $region31: #{tpu_custom_call.1} parent=11 // pred_region
          _
        $region32: #{tpu_custom_call.1} parent=11 // pred_fallthru
          _
        // Predicated region
        $region33: #{tpu_custom_call.1} parent=11 // pred_check
          %p558 = pneg %p491
        $region34: #{tpu_custom_call.1} parent=11 // pred_check_branch
          %560 = sbr.rel (%p558) target = $region36
        $region35: #{tpu_custom_call.1} parent=11 // pred_region
          _
        $region36: #{tpu_custom_call.1} parent=11 // pred_fallthru
          _
      $region12: #{tpu_custom_call.1} parent=5 // pred_fallthru
        _
      %p561 = scmp.lt.s32.totalorder %s31, 2
      // Predicated region
      $region37: #{tpu_custom_call.1} parent=5 // pred_check
        %p562 = pneg %p561
      $region38: #{tpu_custom_call.1} parent=5 // pred_check_branch
        %564 = sbr.rel (%p562) target = $region40
      $region39: #{tpu_custom_call.1} parent=5 // pred_region
        // Predicated region
        $region41: #{tpu_custom_call.1} parent=39 // pred_check
          %p565 = pneg %p115
        $region42: #{tpu_custom_call.1} parent=39 // pred_check_branch
          %567 = sbr.rel (%p565) target = $region44
        $region43: #{tpu_custom_call.1} parent=39 // pred_region
          %p568 = scmp.lt.s32.totalorder %s39, 1
          %s569 = scalar_select %p568, %s39, 1
          %s570 = scalar_lea.vmem %s2, %s569
        $region44: #{tpu_custom_call.1} parent=39 // pred_fallthru
          _
        // Predicated region
        $region45: #{tpu_custom_call.1} parent=39 // pred_check
          %p571 = pneg %p141
        $region46: #{tpu_custom_call.1} parent=39 // pred_check_branch
          %573 = sbr.rel (%p571) target = $region48
        $region47: #{tpu_custom_call.1} parent=39 // pred_region
          %p574 = scmp.lt.s32.totalorder %s39, 1
          %s575 = scalar_select %p574, %s39, 1
          %s576 = scalar_lea.vmem %s3, %s575
        $region48: #{tpu_custom_call.1} parent=39 // pred_fallthru
          _
        // Predicated region
        $region49: #{tpu_custom_call.1} parent=39 // pred_check
          %p577 = pneg %p167
        $region50: #{tpu_custom_call.1} parent=39 // pred_check_branch
          %579 = sbr.rel (%p577) target = $region52
        $region51: #{tpu_custom_call.1} parent=39 // pred_region
          %p580 = scmp.lt.s32.totalorder %s39, 1
          %s581 = scalar_select %p580, %s39, 1
          %s582 = smul.addr %s581, 4
          %s583 = smul.addr %s582, 4
          %s584 = scalar_lea.vmem %s4, %s583
        $region52: #{tpu_custom_call.1} parent=39 // pred_fallthru
          _
        // Predicated region
        $region53: #{tpu_custom_call.1} parent=39 // pred_check
          %p585 = pneg %p193
        $region54: #{tpu_custom_call.1} parent=39 // pred_check_branch
          %587 = sbr.rel (%p585) target = $region56
        $region55: #{tpu_custom_call.1} parent=39 // pred_region
          %p588 = scmp.lt.s32.totalorder %s39, 1
          %s589 = scalar_select %p588, %s39, 1
          %s590 = scalar_lea.vmem %s5, %s589
        $region56: #{tpu_custom_call.1} parent=39 // pred_fallthru
          _
        // Predicated region
        $region57: #{tpu_custom_call.1} parent=39 // pred_check
          %p591 = pneg %p219
        $region58: #{tpu_custom_call.1} parent=39 // pred_check_branch
          %593 = sbr.rel (%p591) target = $region60
        $region59: #{tpu_custom_call.1} parent=39 // pred_region
          %p594 = scmp.lt.s32.totalorder %s39, 1
          %s595 = scalar_select %p594, %s39, 1
          %s596 = smul.addr %s595, 4
          %s597 = smul.addr %s596, 4
          %s598 = scalar_lea.vmem %s6, %s597
        $region60: #{tpu_custom_call.1} parent=39 // pred_fallthru
          _
        // Predicated region
        $region61: #{tpu_custom_call.1} parent=39 // pred_check
          %p599 = pneg %p245
        $region62: #{tpu_custom_call.1} parent=39 // pred_check_branch
          %601 = sbr.rel (%p599) target = $region64
        $region63: #{tpu_custom_call.1} parent=39 // pred_region
          %p602 = scmp.lt.s32.totalorder %s39, 1
          %s603 = scalar_select %p602, %s39, 1
          %s604 = scalar_lea.vmem %s7, %s603
        $region64: #{tpu_custom_call.1} parent=39 // pred_fallthru
          _
        // Predicated region
        $region65: #{tpu_custom_call.1} parent=39 // pred_check
          %p605 = pneg %p271
        $region66: #{tpu_custom_call.1} parent=39 // pred_check_branch
          %607 = sbr.rel (%p605) target = $region68
        $region67: #{tpu_custom_call.1} parent=39 // pred_region
          %p608 = scmp.lt.s32.totalorder %s39, 1
          %s609 = scalar_select %p608, %s39, 1
          %s610 = scalar_lea.vmem %s8, %s609
        $region68: #{tpu_custom_call.1} parent=39 // pred_fallthru
          _
        // Predicated region
        $region69: #{tpu_custom_call.1} parent=39 // pred_check
          %p611 = pneg %p297
        $region70: #{tpu_custom_call.1} parent=39 // pred_check_branch
          %613 = sbr.rel (%p611) target = $region72
        $region71: #{tpu_custom_call.1} parent=39 // pred_region
          %s614 = sand.u32 %s287, 1
          %s615 = scalar_lea.sflag [#allocation4], %s614
          %s616 = sand.u32 %s287, 1
          %s617 = scalar_lea.vmem [#allocation3], %s616
          %s619 = ssub.s32 16, 16
          %620 = vsyncadd %s615, %s619
          %s621 = smul.addr %s39, 16
          %s622 = scalar_lea.hbm %s9, %s621
          %s624 = sshll.u32 %s617, 4
          %s625 = int_to_ptr.vmem [resolvable:$true] %s624
          %627 = dma.hbm_to_vmem [thread:$0]  %s622, 16, %s625, %s615
        $region72: #{tpu_custom_call.1} parent=39 // pred_fallthru
          _
        // Predicated region
        $region73: #{tpu_custom_call.1} parent=39 // pred_check
          %p628 = pneg %p323
        $region74: #{tpu_custom_call.1} parent=39 // pred_check_branch
          %630 = sbr.rel (%p628) target = $region76
        $region75: #{tpu_custom_call.1} parent=39 // pred_region
          %p631 = scmp.lt.s32.totalorder %s39, 1
          %s632 = scalar_select %p631, %s39, 1
          %s633 = smul.addr %s632, 4
          %s634 = smul.addr %s633, 4
          %s635 = scalar_lea.vmem %s10, %s634
        $region76: #{tpu_custom_call.1} parent=39 // pred_fallthru
          _
        // Predicated region
        $region77: #{tpu_custom_call.1} parent=39 // pred_check
          %p636 = pneg %p349
        $region78: #{tpu_custom_call.1} parent=39 // pred_check_branch
          %638 = sbr.rel (%p636) target = $region80
        $region79: #{tpu_custom_call.1} parent=39 // pred_region
          %s639 = sand.u32 %s339, 1
          %s640 = scalar_lea.sflag [#allocation7], %s639
          %s641 = sand.u32 %s339, 1
          %s642 = scalar_lea.vmem [#allocation6], %s641
          %s644 = ssub.s32 16, 16
          %645 = vsyncadd %s640, %s644
          %s646 = smul.addr %s39, 16
          %s647 = scalar_lea.hbm %s11, %s646
          %s649 = sshll.u32 %s642, 4
          %s650 = int_to_ptr.vmem [resolvable:$true] %s649
          %652 = dma.hbm_to_vmem [thread:$0]  %s647, 16, %s650, %s640
        $region80: #{tpu_custom_call.1} parent=39 // pred_fallthru
          _
        // Predicated region
        $region81: #{tpu_custom_call.1} parent=39 // pred_check
          %p653 = pneg %p375
        $region82: #{tpu_custom_call.1} parent=39 // pred_check_branch
          %655 = sbr.rel (%p653) target = $region84
        $region83: #{tpu_custom_call.1} parent=39 // pred_region
          %p656 = scmp.lt.s32.totalorder %s39, 1
          %s657 = scalar_select %p656, %s39, 1
          %s658 = smul.addr %s657, 8
          %s659 = smul.addr %s658, 4
          %s660 = scalar_lea.vmem %s12, %s659
        $region84: #{tpu_custom_call.1} parent=39 // pred_fallthru
          _
        // Predicated region
        $region85: #{tpu_custom_call.1} parent=39 // pred_check
          %p661 = pneg %p401
        $region86: #{tpu_custom_call.1} parent=39 // pred_check_branch
          %663 = sbr.rel (%p661) target = $region88
        $region87: #{tpu_custom_call.1} parent=39 // pred_region
          %p664 = scmp.lt.s32.totalorder %s39, 1
          %s665 = scalar_select %p664, %s39, 1
          %s666 = scalar_lea.vmem %s13, %s665
        $region88: #{tpu_custom_call.1} parent=39 // pred_fallthru
          _
      $region40: #{tpu_custom_call.1} parent=5 // pred_fallthru
        _
      %p667 = scmp.le.s32.totalorder 1, %s31
      %p668 = scmp.lt.s32.totalorder %s31, 3
      %p669 = pnand %p667, %p668
      %p670 = pneg %p669
      // Predicated region
      $region89: #{tpu_custom_call.1} parent=5 // pred_check
        _
      $region90: #{tpu_custom_call.1} parent=5 // pred_check_branch
        %672 = sbr.rel (%p669) target = $region92
      $region91: #{tpu_custom_call.1} parent=5 // pred_region
        %s673 = ssub.s32 %s31, 1
        %s674 = sand.u32 %s290, 1
        %s675 = scalar_lea.sflag [#allocation4], %s674
        %s676 = sand.u32 %s290, 1
        %s677 = scalar_lea.vmem [#allocation3], %s676
        // Predicated region
        $region93: #{tpu_custom_call.1} parent=91 // pred_check
          %p678 = pneg %p303
        $region94: #{tpu_custom_call.1} parent=91 // pred_check_branch
          %680 = sbr.rel (%p678) target = $region96
        $region95: #{tpu_custom_call.1} parent=91 // pred_region
          %681 = dma.done %s675, 16
        $region96: #{tpu_custom_call.1} parent=91 // pred_fallthru
          _
        %s682 = sand.u32 %s342, 1
        %s683 = scalar_lea.sflag [#allocation7], %s682
        %s684 = sand.u32 %s342, 1
        %s685 = scalar_lea.vmem [#allocation6], %s684
        // Predicated region
        $region97: #{tpu_custom_call.1} parent=91 // pred_check
          %p686 = pneg %p355
        $region98: #{tpu_custom_call.1} parent=91 // pred_check_branch
          %688 = sbr.rel (%p686) target = $region100
        $region99: #{tpu_custom_call.1} parent=91 // pred_region
          %689 = dma.done %s683, 16
        $region100: #{tpu_custom_call.1} parent=91 // pred_fallthru
          _
        %s690 = smul.u32 2, %s40
        %p691 = scmp.lt.s32.totalorder %s690, 1
        %s692 = scalar_select %p691, %s690, 1
        %s693 = smul.addr %s692, 8
        %s694 = scalar_lea.vmem %s0, %s693
        %p695 = pneg %p69
        %p696 = pneg %p66
        %s697 = smul.u32 2, %s40
        %p698 = scmp.lt.s32.totalorder %s697, 1
        %s699 = scalar_select %p698, %s697, 1
        %s700 = scalar_lea.vmem %s1, %s699
        %p701 = pneg %p95
        %p702 = pneg %p92
        %p703 = scmp.lt.s32.totalorder %s41, 1
        %s704 = scalar_select %p703, %s41, 1
        %s705 = scalar_lea.vmem %s2, %s704
        %p706 = pneg %p121
        %p707 = pneg %p118
        %p708 = scmp.lt.s32.totalorder %s41, 1
        %s709 = scalar_select %p708, %s41, 1
        %s710 = scalar_lea.vmem %s3, %s709
        %p711 = pneg %p147
        %p712 = pneg %p144
        %p713 = scmp.lt.s32.totalorder %s41, 1
        %s714 = scalar_select %p713, %s41, 1
        %s715 = smul.addr %s714, 4
        %s716 = smul.addr %s715, 4
        %s717 = scalar_lea.vmem %s4, %s716
        %p718 = pneg %p173
        %p719 = pneg %p170
        %p720 = scmp.lt.s32.totalorder %s41, 1
        %s721 = scalar_select %p720, %s41, 1
        %s722 = scalar_lea.vmem %s5, %s721
        %p723 = pneg %p199
        %p724 = pneg %p196
        %p725 = scmp.lt.s32.totalorder %s41, 1
        %s726 = scalar_select %p725, %s41, 1
        %s727 = smul.addr %s726, 4
        %s728 = smul.addr %s727, 4
        %s729 = scalar_lea.vmem %s6, %s728
        %p730 = pneg %p225
        %p731 = pneg %p222
        %p732 = scmp.lt.s32.totalorder %s41, 1
        %s733 = scalar_select %p732, %s41, 1
        %s734 = scalar_lea.vmem %s7, %s733
        %p735 = pneg %p251
        %p736 = pneg %p248
        %p737 = scmp.lt.s32.totalorder %s41, 1
        %s738 = scalar_select %p737, %s41, 1
        %s739 = scalar_lea.vmem %s8, %s738
        %p740 = pneg %p277
        %p741 = pneg %p274
        %s742 = sand.u32 %s290, 1
        %s743 = scalar_lea.sflag [#allocation4], %s742
        %s744 = sand.u32 %s290, 1
        %s745 = scalar_lea.vmem [#allocation3], %s744
        %p746 = pneg %p303
        %p747 = pneg %p300
        %p748 = scmp.lt.s32.totalorder %s41, 1
        %s749 = scalar_select %p748, %s41, 1
        %s750 = smul.addr %s749, 4
        %s751 = smul.addr %s750, 4
        %s752 = scalar_lea.vmem %s10, %s751
        %p753 = pneg %p329
        %p754 = pneg %p326
        %s755 = sand.u32 %s342, 1
        %s756 = scalar_lea.sflag [#allocation7], %s755
        %s757 = sand.u32 %s342, 1
        %s758 = scalar_lea.vmem [#allocation6], %s757
        %p759 = pneg %p355
        %p760 = pneg %p352
        %p761 = scmp.lt.s32.totalorder %s41, 1
        %s762 = scalar_select %p761, %s41, 1
        %s763 = smul.addr %s762, 8
        %s764 = smul.addr %s763, 4
        %s765 = scalar_lea.vmem %s12, %s764
        %p766 = pneg %p381
        %p767 = pneg %p378
        %p768 = scmp.lt.s32.totalorder %s41, 1
        %s769 = scalar_select %p768, %s41, 1
        %s770 = scalar_lea.vmem %s13, %s769
        %p771 = pneg %p407
        %p772 = pneg %p404
        %p773 = pneg %p428
        %p774 = pneg %p425
        %p775 = pneg %p449
        %p776 = pneg %p446
        %p777 = pneg %p470
        %p778 = pneg %p467
        %p779 = pneg %p491
        %p780 = pneg %p488
        %p781 = pneg %p517
        %p782 = pneg %p514
        %s783 = smul.u32 2, %s40
        %p784 = scmp.lt.s32.totalorder %s783, 1
        %s785 = scalar_select %p784, %s783, 1
        %s786 = smul.addr %s785, 8
        %s787 = scalar_lea.vmem %s0, %s786
        %s788 = smul.u32 2, %s40
        %s789 = smul.u32 2, %s40
        %p790 = scmp.lt.s32.totalorder %s789, 1
        %s791 = scalar_select %p790, %s789, 1
        %s792 = scalar_lea.vmem %s1, %s791
        %s793 = smul.u32 2, %s40
        %p794 = scmp.lt.s32.totalorder %s41, 1
        %s795 = scalar_select %p794, %s41, 1
        %s796 = scalar_lea.vmem %s2, %s795
        %p797 = scmp.lt.s32.totalorder %s41, 1
        %s798 = scalar_select %p797, %s41, 1
        %s799 = scalar_lea.vmem %s3, %s798
        %p800 = scmp.lt.s32.totalorder %s41, 1
        %s801 = scalar_select %p800, %s41, 1
        %s802 = smul.addr %s801, 4
        %s803 = smul.addr %s802, 4
        %s804 = scalar_lea.vmem %s4, %s803
        %p805 = scmp.lt.s32.totalorder %s41, 1
        %s806 = scalar_select %p805, %s41, 1
        %s807 = scalar_lea.vmem %s5, %s806
        %p808 = scmp.lt.s32.totalorder %s41, 1
        %s809 = scalar_select %p808, %s41, 1
        %s810 = smul.addr %s809, 4
        %s811 = smul.addr %s810, 4
        %s812 = scalar_lea.vmem %s6, %s811
        %p813 = scmp.lt.s32.totalorder %s41, 1
        %s814 = scalar_select %p813, %s41, 1
        %s815 = scalar_lea.vmem %s7, %s814
        %p816 = scmp.lt.s32.totalorder %s41, 1
        %s817 = scalar_select %p816, %s41, 1
        %s818 = scalar_lea.vmem %s8, %s817
        %p819 = scmp.lt.s32.totalorder %s41, 1
        %s820 = scalar_select %p819, %s41, 1
        %s821 = smul.addr %s820, 4
        %s822 = smul.addr %s821, 4
        %s823 = scalar_lea.vmem %s10, %s822
        %p824 = scmp.lt.s32.totalorder %s41, 1
        %s825 = scalar_select %p824, %s41, 1
        %s826 = smul.addr %s825, 8
        %s827 = smul.addr %s826, 4
        %s828 = scalar_lea.vmem %s12, %s827
        %p829 = scmp.lt.s32.totalorder %s41, 1
        %s830 = scalar_select %p829, %s41, 1
        %s831 = scalar_lea.vmem %s13, %s830
        %p833 = scmp.eq.s32.totalorder %s41, 0
        // Predicated region
        $region101: #{tpu_custom_call.1} parent=91 // pred_check
          %p834 = pneg %p833
        $region102: #{tpu_custom_call.1} parent=91 // pred_check_branch
          %836 = sbr.rel (%p834) target = $region104
        $region103: #{tpu_custom_call.1} parent=91 // pred_region
          %v837 = vld [vmem:[%s787] sm:$0xff]
          %v838 = vld [vmem:[%s787 + $0x8] sm:$0xff]
          %vm839 = vcmask 261120
          %840 = vst.msk [vmem:[#allocation2] sm:$0xff] %vm839, %v837
          %841 = vst.msk [vmem:[#allocation2 + $0x8] sm:$0xff] %vm839, %v838
        $region104: #{tpu_custom_call.1} parent=91 // pred_fallthru
          _
        %v842 = vld [vmem:[#allocation2] sm:$0xff]
        %v843 = vld [vmem:[#allocation2 + $0x8] sm:$0xff]
        %v844 = vld [vmem:[%s792] sm:$0x1]
        %v845 = vld [vmem:[%s792 + $0x1] sm:$0x1]
        %v846 = vld [vmem:[%s796] sm:$0x1]
        %v847 = vld [vmem:[%s799] sm:$0x1]
        %vm848 = vcmask 261120
        %v849 = vsel %vm848, %v842, 0.0
        %850 = vadd.xlane.f32.xlu0 %v849
        %v851 = vpop.xlane.xlu0 %850
        %v852 = vsel %vm848, %v843, 0.0
        %853 = vadd.xlane.f32.xlu0 %v852
        %v854 = vpop.xlane.xlu0 %853
        %v855 = vrcp.pop 32.0
        %v856 = vmul.f32 %v851, %v855
        %v857 = vmul.f32 %v854, %v855
        %v858 = vsub.f32 %v842, %v856
        %v859 = vsub.f32 %v843, %v857
        %v860 = vmul.f32 %v858, %v858
        %v861 = vmul.f32 %v859, %v859
        %v862 = vsel %vm848, %v860, 0.0
        %863 = vadd.xlane.f32.xlu0 %v862
        %v864 = vpop.xlane.xlu0 %863
        %v865 = vsel %vm848, %v861, 0.0
        %866 = vadd.xlane.f32.xlu0 %v865
        %v867 = vpop.xlane.xlu0 %866
        %v868 = vmul.f32 %v864, %v855
        %v869 = vmul.f32 %v867, %v855
        %v870 = vadd.f32 %v868, 1e-05
        %v871 = vadd.f32 %v869, 1e-05
        %v872 = vrsqrt.pop %v870
        %v873 = vrsqrt.pop %v871
        %v874 = vmul.f32 %v858, %v872
        %v875 = vmul.f32 %v859, %v873
        %v877 = vlaneseq
        %v878 = vshrl.u32 %v877, 7
        %v879 = vsub.s32 0, %v878
        %v880 = vrot.slane %v846, %v879
        %v882 = vmul.f32 %v874, %v880
        %v883 = vmul.f32 %v875, %v880
        %v885 = vlaneseq
        %v886 = vshrl.u32 %v885, 7
        %v887 = vsub.s32 0, %v886
        %v888 = vrot.slane %v847, %v887
        %v890 = vadd.f32 %v882, %v888
        %v891 = vadd.f32 %v883, %v888
        %v892 = vpack.c.bf16 %v891, %v890
        %v893 = vld [vmem:[%s804] sm:$0xf]
        %v894 = vld [vmem:[%s804 + $0x4] sm:$0xf]
        %v895 = vld [vmem:[%s804 + $0x8] sm:$0xf]
        %v896 = vld [vmem:[%s804 + $0xc] sm:$0xf]
        %v897 = vld [vmem:[%s807] sm:$0x1]
        %v899 = vlaneseq
        %v900 = vshrl.u32 %v899, 7
        %v901 = vsub.s32 0, %v900
        %v902 = vrot.slane %v897, %v901
        %v908 = vunpack.c.l.b16 %v893
        %v909 = vunpack.c.l.b16 %v894
        %v910 = vunpack.c.l.b16 %v895
        %v911 = vunpack.c.l.b16 %v896
        %v912 = vpack.c.b16 %v909, %v908
        %v913 = vpack.c.b16 %v911, %v910
        %v917 = vsel %vm848, %v892, 0
        %919 = vmatprep.subr.bf16.mxu0 0
        %920 = vmatpush1.bf16.msra.mxu0 %v912
        %921 = vmatprep.subr.bf16.mxu0 0
        %922 = vmatpush1.bf16.msra.mxu0 %v913
        %923 = vmatprep.subr.bf16.mxu0 0
        %924 = vmatpush1.bf16.msra.mxu0 0
        %925 = vmatprep.subr.bf16.mxu0 0
        %926 = vmatpush1.bf16.msra.mxu0 0
        %927 = vmatprep.subr.bf16.mxu0 0
        %928 = vmatpush1.bf16.msra.mxu0 0
        %929 = vmatprep.subr.bf16.mxu0 0
        %930 = vmatpush1.bf16.msra.mxu0 0
        %931 = vmatprep.subr.bf16.mxu0 0
        %932 = vmatpush1.bf16.msra.mxu0 0
        %933 = vmatprep.subr.bf16.mxu0 0
        %934 = vmatpush1.bf16.msra.mxu0 0
        %935 = vmatprep.subr.bf16.mxu0 0
        %936 = vmatpush1.bf16.msra.mxu0 0
        %937 = vmatprep.subr.bf16.mxu0 0
        %938 = vmatpush1.bf16.msra.mxu0 0
        %939 = vmatprep.subr.bf16.mxu0 0
        %940 = vmatpush1.bf16.msra.mxu0 0
        %941 = vmatprep.subr.bf16.mxu0 0
        %942 = vmatpush1.bf16.msra.mxu0 0
        %943 = vmatprep.subr.bf16.mxu0 0
        %944 = vmatpush1.bf16.msra.mxu0 0
        %945 = vmatprep.subr.bf16.mxu0 0
        %946 = vmatpush1.bf16.msra.mxu0 0
        %947 = vmatprep.subr.bf16.mxu0 0
        %948 = vmatpush1.bf16.msra.mxu0 0
        %949 = vmatprep.subr.bf16.mxu0 0
        %950 = vmatpush1.bf16.msra.mxu0 0
        %951 = vmatprep.mubr.bf16.mxu0 0
        %952 = vmatmul.mubr.bf16.gmra.mrb[0].mxu0 %v917
        %v953 = vpop.f32.mrb[0].mxu0
        %v954 = vadd.f32 %v902, %v953
        %v955 = vpop.f32.mrb[0].mxu0
        %v956 = vpop.f32.mrb[0].mxu0
        %v957 = vadd.f32 %v902, %v956
        %v958 = vpop.f32.mrb[0].mxu0
        %959 = vdwg.mxu0
        %962 = vrot.lane.b32.xlu0 %v954, 104
        %v963 = vpop.permute.xlu0 %962
        %964 = vrot.lane.b32.xlu0 %v957, 104
        %v965 = vpop.permute.xlu0 %964
        %968 = vrot.lane.b32.xlu0 %v954, 80
        %v969 = vpop.permute.xlu0 %968
        %970 = vrot.lane.b32.xlu0 %v957, 80
        %v971 = vpop.permute.xlu0 %970
        %974 = vrot.lane.b32.xlu0 %v954, 56
        %v975 = vpop.permute.xlu0 %974
        %976 = vrot.lane.b32.xlu0 %v957, 56
        %v977 = vpop.permute.xlu0 %976
        %v980 = vpack.c.bf16 %v954, %v954
        %v981 = vpack.c.bf16 %v963, %v963
        %v982 = vpack.c.bf16 %v969, %v969
        %v983 = vpack.c.bf16 %v975, %v975
        %v984 = vpack.c.bf16 %v957, %v957
        %v985 = vpack.c.bf16 %v965, %v965
        %v986 = vpack.c.bf16 %v971, %v971
        %v987 = vpack.c.bf16 %v977, %v977
        %989 = vrot.lane.b32.xlu0 %v980, 120
        %v990 = vpop.permute.xlu0 %989
        %vm991 = vcmask 64512
        %v993 = vsel %vm991, %v980, 0
        %v996 = vsel %vm991, %v990, 0
        %998 = vmatprep.subr.bf16.mxu0 0
        %999 = vmatpush1.bf16.xpose.msra.mxu0 %v996
        %1000 = vmatprep.subr.bf16.mxu0 0
        %1001 = vmatpush1.bf16.xpose.msra.mxu0 0
        %1002 = vmatprep.subr.bf16.mxu0 0
        %1003 = vmatpush1.bf16.xpose.msra.mxu0 0
        %1004 = vmatprep.subr.bf16.mxu0 0
        %1005 = vmatpush1.bf16.xpose.msra.mxu0 0
        %1006 = vmatprep.subr.bf16.mxu0 0
        %1007 = vmatpush1.bf16.xpose.msra.mxu0 0
        %1008 = vmatprep.subr.bf16.mxu0 0
        %1009 = vmatpush1.bf16.xpose.msra.mxu0 0
        %1010 = vmatprep.subr.bf16.mxu0 0
        %1011 = vmatpush1.bf16.xpose.msra.mxu0 0
        %1012 = vmatprep.subr.bf16.mxu0 0
        %1013 = vmatpush1.bf16.xpose.msra.mxu0 0
        %1014 = vmatprep.subr.bf16.mxu0 0
        %1015 = vmatpush1.bf16.xpose.msra.mxu0 0
        %1016 = vmatprep.subr.bf16.mxu0 0
        %1017 = vmatpush1.bf16.xpose.msra.mxu0 0
        %1018 = vmatprep.subr.bf16.mxu0 0
        %1019 = vmatpush1.bf16.xpose.msra.mxu0 0
        %1020 = vmatprep.subr.bf16.mxu0 0
        %1021 = vmatpush1.bf16.xpose.msra.mxu0 0
        %1022 = vmatprep.subr.bf16.mxu0 0
        %1023 = vmatpush1.bf16.xpose.msra.mxu0 0
        %1024 = vmatprep.subr.bf16.mxu0 0
        %1025 = vmatpush1.bf16.xpose.msra.mxu0 0
        %1026 = vmatprep.subr.bf16.mxu0 0
        %1027 = vmatpush1.bf16.xpose.msra.mxu0 0
        %1028 = vmatprep.subr.bf16.mxu0 0
        %1029 = vmatpush1.bf16.xpose.msra.mxu0 0
        %1030 = vmatprep.mubr.bf16.mxu0 0
        %1031 = vmatmul.mubr.bf16.gmra.mrb[0].mxu0 %v993
        %v1032 = vpop.f32.mrb[0].mxu0
        %v1033 = vadd.f32 0.0, %v1032
        %v1034 = vpop.f32.mrb[0].mxu0
        %v1035 = vpop.f32.mrb[0].mxu0
        %v1036 = vpop.f32.mrb[0].mxu0
        %1037 = vdwg.mxu0
        %1039 = vrot.lane.b32.xlu0 %v981, 120
        %v1040 = vpop.permute.xlu0 %1039
        %v1042 = vsel %vm991, %v981, 0
        %v1045 = vsel %vm991, %v1040, 0
        %1047 = vmatprep.subr.bf16.mxu0 0
        %1048 = vmatpush1.bf16.xpose.msra.mxu0 %v1045
        %1049 = vmatprep.subr.bf16.mxu0 0
        %1050 = vmatpush1.bf16.xpose.msra.mxu0 0
        %1051 = vmatprep.subr.bf16.mxu0 0
        %1052 = vmatpush1.bf16.xpose.msra.mxu0 0
        %1053 = vmatprep.subr.bf16.mxu0 0
        %1054 = vmatpush1.bf16.xpose.msra.mxu0 0
        %1055 = vmatprep.subr.bf16.mxu0 0
        %1056 = vmatpush1.bf16.xpose.msra.mxu0 0
        %1057 = vmatprep.subr.bf16.mxu0 0
        %1058 = vmatpush1.bf16.xpose.msra.mxu0 0
        %1059 = vmatprep.subr.bf16.mxu0 0
        %1060 = vmatpush1.bf16.xpose.msra.mxu0 0
        %1061 = vmatprep.subr.bf16.mxu0 0
        %1062 = vmatpush1.bf16.xpose.msra.mxu0 0
        %1063 = vmatprep.subr.bf16.mxu0 0
        %1064 = vmatpush1.bf16.xpose.msra.mxu0 0
        %1065 = vmatprep.subr.bf16.mxu0 0
        %1066 = vmatpush1.bf16.xpose.msra.mxu0 0
        %1067 = vmatprep.subr.bf16.mxu0 0
        %1068 = vmatpush1.bf16.xpose.msra.mxu0 0
        %1069 = vmatprep.subr.bf16.mxu0 0
        %1070 = vmatpush1.bf16.xpose.msra.mxu0 0
        %1071 = vmatprep.subr.bf16.mxu0 0
        %1072 = vmatpush1.bf16.xpose.msra.mxu0 0
        %1073 = vmatprep.subr.bf16.mxu0 0
        %1074 = vmatpush1.bf16.xpose.msra.mxu0 0
        %1075 = vmatprep.subr.bf16.mxu0 0
        %1076 = vmatpush1.bf16.xpose.msra.mxu0 0
        %1077 = vmatprep.subr.bf16.mxu0 0
        %1078 = vmatpush1.bf16.xpose.msra.mxu0 0
        %1079 = vmatprep.mubr.bf16.mxu0 0
        %1080 = vmatmul.mubr.bf16.gmra.mrb[0].mxu0 %v1042
        %v1081 = vpop.f32.mrb[0].mxu0
        %v1082 = vadd.f32 0.0, %v1081
        %v1083 = vpop.f32.mrb[0].mxu0
        %v1084 = vpop.f32.mrb[0].mxu0
        %v1085 = vpop.f32.mrb[0].mxu0
        %1086 = vdwg.mxu0
        %1088 = vrot.lane.b32.xlu0 %v982, 120
        %v1089 = vpop.permute.xlu0 %1088
        %v1091 = vsel %vm991, %v982, 0
        %v1094 = vsel %vm991, %v1089, 0
        %1096 = vmatprep.subr.bf16.mxu0 0
        %1097 = vmatpush1.bf16.xpose.msra.mxu0 %v1094
        %1098 = vmatprep.subr.bf16.mxu0 0
        %1099 = vmatpush1.bf16.xpose.msra.mxu0 0
        %1100 = vmatprep.subr.bf16.mxu0 0
        %1101 = vmatpush1.bf16.xpose.msra.mxu0 0
        %1102 = vmatprep.subr.bf16.mxu0 0
        %1103 = vmatpush1.bf16.xpose.msra.mxu0 0
        %1104 = vmatprep.subr.bf16.mxu0 0
        %1105 = vmatpush1.bf16.xpose.msra.mxu0 0
        %1106 = vmatprep.subr.bf16.mxu0 0
        %1107 = vmatpush1.bf16.xpose.msra.mxu0 0
        %1108 = vmatprep.subr.bf16.mxu0 0
        %1109 = vmatpush1.bf16.xpose.msra.mxu0 0
        %1110 = vmatprep.subr.bf16.mxu0 0
        %1111 = vmatpush1.bf16.xpose.msra.mxu0 0
        %1112 = vmatprep.subr.bf16.mxu0 0
        %1113 = vmatpush1.bf16.xpose.msra.mxu0 0
        %1114 = vmatprep.subr.bf16.mxu0 0
        %1115 = vmatpush1.bf16.xpose.msra.mxu0 0
        %1116 = vmatprep.subr.bf16.mxu0 0
        %1117 = vmatpush1.bf16.xpose.msra.mxu0 0
        %1118 = vmatprep.subr.bf16.mxu0 0
        %1119 = vmatpush1.bf16.xpose.msra.mxu0 0
        %1120 = vmatprep.subr.bf16.mxu0 0
        %1121 = vmatpush1.bf16.xpose.msra.mxu0 0
        %1122 = vmatprep.subr.bf16.mxu0 0
        %1123 = vmatpush1.bf16.xpose.msra.mxu0 0
        %1124 = vmatprep.subr.bf16.mxu0 0
        %1125 = vmatpush1.bf16.xpose.msra.mxu0 0
        %1126 = vmatprep.subr.bf16.mxu0 0
        %1127 = vmatpush1.bf16.xpose.msra.mxu0 0
        %1128 = vmatprep.mubr.bf16.mxu0 0
        %1129 = vmatmul.mubr.bf16.gmra.mrb[0].mxu0 %v1091
        %v1130 = vpop.f32.mrb[0].mxu0
        %v1131 = vadd.f32 0.0, %v1130
        %v1132 = vpop.f32.mrb[0].mxu0
        %v1133 = vpop.f32.mrb[0].mxu0
        %v1134 = vpop.f32.mrb[0].mxu0
        %1135 = vdwg.mxu0
        %1137 = vrot.lane.b32.xlu0 %v983, 120
        %v1138 = vpop.permute.xlu0 %1137
        %v1140 = vsel %vm991, %v983, 0
        %v1143 = vsel %vm991, %v1138, 0
        %1145 = vmatprep.subr.bf16.mxu0 0
        %1146 = vmatpush1.bf16.xpose.msra.mxu0 %v1143
        %1147 = vmatprep.subr.bf16.mxu0 0
        %1148 = vmatpush1.bf16.xpose.msra.mxu0 0
        %1149 = vmatprep.subr.bf16.mxu0 0
        %1150 = vmatpush1.bf16.xpose.msra.mxu0 0
        %1151 = vmatprep.subr.bf16.mxu0 0
        %1152 = vmatpush1.bf16.xpose.msra.mxu0 0
        %1153 = vmatprep.subr.bf16.mxu0 0
        %1154 = vmatpush1.bf16.xpose.msra.mxu0 0
        %1155 = vmatprep.subr.bf16.mxu0 0
        %1156 = vmatpush1.bf16.xpose.msra.mxu0 0
        %1157 = vmatprep.subr.bf16.mxu0 0
        %1158 = vmatpush1.bf16.xpose.msra.mxu0 0
        %1159 = vmatprep.subr.bf16.mxu0 0
        %1160 = vmatpush1.bf16.xpose.msra.mxu0 0
        %1161 = vmatprep.subr.bf16.mxu0 0
        %1162 = vmatpush1.bf16.xpose.msra.mxu0 0
        %1163 = vmatprep.subr.bf16.mxu0 0
        %1164 = vmatpush1.bf16.xpose.msra.mxu0 0
        %1165 = vmatprep.subr.bf16.mxu0 0
        %1166 = vmatpush1.bf16.xpose.msra.mxu0 0
        %1167 = vmatprep.subr.bf16.mxu0 0
        %1168 = vmatpush1.bf16.xpose.msra.mxu0 0
        %1169 = vmatprep.subr.bf16.mxu0 0
        %1170 = vmatpush1.bf16.xpose.msra.mxu0 0
        %1171 = vmatprep.subr.bf16.mxu0 0
        %1172 = vmatpush1.bf16.xpose.msra.mxu0 0
        %1173 = vmatprep.subr.bf16.mxu0 0
        %1174 = vmatpush1.bf16.xpose.msra.mxu0 0
        %1175 = vmatprep.subr.bf16.mxu0 0
        %1176 = vmatpush1.bf16.xpose.msra.mxu0 0
        %1177 = vmatprep.mubr.bf16.mxu0 0
        %1178 = vmatmul.mubr.bf16.gmra.mrb[0].mxu0 %v1140
        %v1179 = vpop.f32.mrb[0].mxu0
        %v1180 = vadd.f32 0.0, %v1179
        %v1181 = vpop.f32.mrb[0].mxu0
        %v1182 = vpop.f32.mrb[0].mxu0
        %v1183 = vpop.f32.mrb[0].mxu0
        %1184 = vdwg.mxu0
        %1186 = vrot.lane.b32.xlu0 %v984, 120
        %v1187 = vpop.permute.xlu0 %1186
        %v1189 = vsel %vm991, %v984, 0
        %v1192 = vsel %vm991, %v1187, 0
        %1194 = vmatprep.subr.bf16.mxu0 0
        %1195 = vmatpush1.bf16.xpose.msra.mxu0 %v1192
        %1196 = vmatprep.subr.bf16.mxu0 0
        %1197 = vmatpush1.bf16.xpose.msra.mxu0 0
        %1198 = vmatprep.subr.bf16.mxu0 0
        %1199 = vmatpush1.bf16.xpose.msra.mxu0 0
        %1200 = vmatprep.subr.bf16.mxu0 0
        %1201 = vmatpush1.bf16.xpose.msra.mxu0 0
        %1202 = vmatprep.subr.bf16.mxu0 0
        %1203 = vmatpush1.bf16.xpose.msra.mxu0 0
        %1204 = vmatprep.subr.bf16.mxu0 0
        %1205 = vmatpush1.bf16.xpose.msra.mxu0 0
        %1206 = vmatprep.subr.bf16.mxu0 0
        %1207 = vmatpush1.bf16.xpose.msra.mxu0 0
        %1208 = vmatprep.subr.bf16.mxu0 0
        %1209 = vmatpush1.bf16.xpose.msra.mxu0 0
        %1210 = vmatprep.subr.bf16.mxu0 0
        %1211 = vmatpush1.bf16.xpose.msra.mxu0 0
        %1212 = vmatprep.subr.bf16.mxu0 0
        %1213 = vmatpush1.bf16.xpose.msra.mxu0 0
        %1214 = vmatprep.subr.bf16.mxu0 0
        %1215 = vmatpush1.bf16.xpose.msra.mxu0 0
        %1216 = vmatprep.subr.bf16.mxu0 0
        %1217 = vmatpush1.bf16.xpose.msra.mxu0 0
        %1218 = vmatprep.subr.bf16.mxu0 0
        %1219 = vmatpush1.bf16.xpose.msra.mxu0 0
        %1220 = vmatprep.subr.bf16.mxu0 0
        %1221 = vmatpush1.bf16.xpose.msra.mxu0 0
        %1222 = vmatprep.subr.bf16.mxu0 0
        %1223 = vmatpush1.bf16.xpose.msra.mxu0 0
        %1224 = vmatprep.subr.bf16.mxu0 0
        %1225 = vmatpush1.bf16.xpose.msra.mxu0 0
        %1226 = vmatprep.mubr.bf16.mxu0 0
        %1227 = vmatmul.mubr.bf16.gmra.mrb[0].mxu0 %v1189
        %v1228 = vpop.f32.mrb[0].mxu0
        %v1229 = vadd.f32 0.0, %v1228
        %v1230 = vpop.f32.mrb[0].mxu0
        %v1231 = vpop.f32.mrb[0].mxu0
        %v1232 = vpop.f32.mrb[0].mxu0
        %1233 = vdwg.mxu0
        %1235 = vrot.lane.b32.xlu0 %v985, 120
        %v1236 = vpop.permute.xlu0 %1235
        %v1238 = vsel %vm991, %v985, 0
        %v1241 = vsel %vm991, %v1236, 0
        %1243 = vmatprep.subr.bf16.mxu0 0
        %1244 = vmatpush1.bf16.xpose.msra.mxu0 %v1241
        %1245 = vmatprep.subr.bf16.mxu0 0
        %1246 = vmatpush1.bf16.xpose.msra.mxu0 0
        %1247 = vmatprep.subr.bf16.mxu0 0
        %1248 = vmatpush1.bf16.xpose.msra.mxu0 0
        %1249 = vmatprep.subr.bf16.mxu0 0
        %1250 = vmatpush1.bf16.xpose.msra.mxu0 0
        %1251 = vmatprep.subr.bf16.mxu0 0
        %1252 = vmatpush1.bf16.xpose.msra.mxu0 0
        %1253 = vmatprep.subr.bf16.mxu0 0
        %1254 = vmatpush1.bf16.xpose.msra.mxu0 0
        %1255 = vmatprep.subr.bf16.mxu0 0
        %1256 = vmatpush1.bf16.xpose.msra.mxu0 0
        %1257 = vmatprep.subr.bf16.mxu0 0
        %1258 = vmatpush1.bf16.xpose.msra.mxu0 0
        %1259 = vmatprep.subr.bf16.mxu0 0
        %1260 = vmatpush1.bf16.xpose.msra.mxu0 0
        %1261 = vmatprep.subr.bf16.mxu0 0
        %1262 = vmatpush1.bf16.xpose.msra.mxu0 0
        %1263 = vmatprep.subr.bf16.mxu0 0
        %1264 = vmatpush1.bf16.xpose.msra.mxu0 0
        %1265 = vmatprep.subr.bf16.mxu0 0
        %1266 = vmatpush1.bf16.xpose.msra.mxu0 0
        %1267 = vmatprep.subr.bf16.mxu0 0
        %1268 = vmatpush1.bf16.xpose.msra.mxu0 0
        %1269 = vmatprep.subr.bf16.mxu0 0
        %1270 = vmatpush1.bf16.xpose.msra.mxu0 0
        %1271 = vmatprep.subr.bf16.mxu0 0
        %1272 = vmatpush1.bf16.xpose.msra.mxu0 0
        %1273 = vmatprep.subr.bf16.mxu0 0
        %1274 = vmatpush1.bf16.xpose.msra.mxu0 0
        %1275 = vmatprep.mubr.bf16.mxu0 0
        %1276 = vmatmul.mubr.bf16.gmra.mrb[0].mxu0 %v1238
        %v1277 = vpop.f32.mrb[0].mxu0
        %v1278 = vadd.f32 0.0, %v1277
        %v1279 = vpop.f32.mrb[0].mxu0
        %v1280 = vpop.f32.mrb[0].mxu0
        %v1281 = vpop.f32.mrb[0].mxu0
        %1282 = vdwg.mxu0
        %1284 = vrot.lane.b32.xlu0 %v986, 120
        %v1285 = vpop.permute.xlu0 %1284
        %v1287 = vsel %vm991, %v986, 0
        %v1290 = vsel %vm991, %v1285, 0
        %1292 = vmatprep.subr.bf16.mxu0 0
        %1293 = vmatpush1.bf16.xpose.msra.mxu0 %v1290
        %1294 = vmatprep.subr.bf16.mxu0 0
        %1295 = vmatpush1.bf16.xpose.msra.mxu0 0
        %1296 = vmatprep.subr.bf16.mxu0 0
        %1297 = vmatpush1.bf16.xpose.msra.mxu0 0
        %1298 = vmatprep.subr.bf16.mxu0 0
        %1299 = vmatpush1.bf16.xpose.msra.mxu0 0
        %1300 = vmatprep.subr.bf16.mxu0 0
        %1301 = vmatpush1.bf16.xpose.msra.mxu0 0
        %1302 = vmatprep.subr.bf16.mxu0 0
        %1303 = vmatpush1.bf16.xpose.msra.mxu0 0
        %1304 = vmatprep.subr.bf16.mxu0 0
        %1305 = vmatpush1.bf16.xpose.msra.mxu0 0
        %1306 = vmatprep.subr.bf16.mxu0 0
        %1307 = vmatpush1.bf16.xpose.msra.mxu0 0
        %1308 = vmatprep.subr.bf16.mxu0 0
        %1309 = vmatpush1.bf16.xpose.msra.mxu0 0
        %1310 = vmatprep.subr.bf16.mxu0 0
        %1311 = vmatpush1.bf16.xpose.msra.mxu0 0
        %1312 = vmatprep.subr.bf16.mxu0 0
        %1313 = vmatpush1.bf16.xpose.msra.mxu0 0
        %1314 = vmatprep.subr.bf16.mxu0 0
        %1315 = vmatpush1.bf16.xpose.msra.mxu0 0
        %1316 = vmatprep.subr.bf16.mxu0 0
        %1317 = vmatpush1.bf16.xpose.msra.mxu0 0
        %1318 = vmatprep.subr.bf16.mxu0 0
        %1319 = vmatpush1.bf16.xpose.msra.mxu0 0
        %1320 = vmatprep.subr.bf16.mxu0 0
        %1321 = vmatpush1.bf16.xpose.msra.mxu0 0
        %1322 = vmatprep.subr.bf16.mxu0 0
        %1323 = vmatpush1.bf16.xpose.msra.mxu0 0
        %1324 = vmatprep.mubr.bf16.mxu0 0
        %1325 = vmatmul.mubr.bf16.gmra.mrb[0].mxu0 %v1287
        %v1326 = vpop.f32.mrb[0].mxu0
        %v1327 = vadd.f32 0.0, %v1326
        %v1328 = vpop.f32.mrb[0].mxu0
        %v1329 = vpop.f32.mrb[0].mxu0
        %v1330 = vpop.f32.mrb[0].mxu0
        %1331 = vdwg.mxu0
        %1333 = vrot.lane.b32.xlu0 %v987, 120
        %v1334 = vpop.permute.xlu0 %1333
        %v1336 = vsel %vm991, %v987, 0
        %v1339 = vsel %vm991, %v1334, 0
        %1341 = vmatprep.subr.bf16.mxu0 0
        %1342 = vmatpush1.bf16.xpose.msra.mxu0 %v1339
        %1343 = vmatprep.subr.bf16.mxu0 0
        %1344 = vmatpush1.bf16.xpose.msra.mxu0 0
        %1345 = vmatprep.subr.bf16.mxu0 0
        %1346 = vmatpush1.bf16.xpose.msra.mxu0 0
        %1347 = vmatprep.subr.bf16.mxu0 0
        %1348 = vmatpush1.bf16.xpose.msra.mxu0 0
        %1349 = vmatprep.subr.bf16.mxu0 0
        %1350 = vmatpush1.bf16.xpose.msra.mxu0 0
        %1351 = vmatprep.subr.bf16.mxu0 0
        %1352 = vmatpush1.bf16.xpose.msra.mxu0 0
        %1353 = vmatprep.subr.bf16.mxu0 0
        %1354 = vmatpush1.bf16.xpose.msra.mxu0 0
        %1355 = vmatprep.subr.bf16.mxu0 0
        %1356 = vmatpush1.bf16.xpose.msra.mxu0 0
        %1357 = vmatprep.subr.bf16.mxu0 0
        %1358 = vmatpush1.bf16.xpose.msra.mxu0 0
        %1359 = vmatprep.subr.bf16.mxu0 0
        %1360 = vmatpush1.bf16.xpose.msra.mxu0 0
        %1361 = vmatprep.subr.bf16.mxu0 0
        %1362 = vmatpush1.bf16.xpose.msra.mxu0 0
        %1363 = vmatprep.subr.bf16.mxu0 0
        %1364 = vmatpush1.bf16.xpose.msra.mxu0 0
        %1365 = vmatprep.subr.bf16.mxu0 0
        %1366 = vmatpush1.bf16.xpose.msra.mxu0 0
        %1367 = vmatprep.subr.bf16.mxu0 0
        %1368 = vmatpush1.bf16.xpose.msra.mxu0 0
        %1369 = vmatprep.subr.bf16.mxu0 0
        %1370 = vmatpush1.bf16.xpose.msra.mxu0 0
        %1371 = vmatprep.subr.bf16.mxu0 0
        %1372 = vmatpush1.bf16.xpose.msra.mxu0 0
        %1373 = vmatprep.mubr.bf16.mxu0 0
        %1374 = vmatmul.mubr.bf16.gmra.mrb[0].mxu0 %v1336
        %v1375 = vpop.f32.mrb[0].mxu0
        %v1376 = vadd.f32 0.0, %v1375
        %v1377 = vpop.f32.mrb[0].mxu0
        %v1378 = vpop.f32.mrb[0].mxu0
        %v1379 = vpop.f32.mrb[0].mxu0
        %1380 = vdwg.mxu0
        %v1383 = vlaneseq
        %v1384 = vshrl.u32 %v1383, 7
        %v1385 = vsub.s32 0, %v1384
        %v1386 = vrot.slane %v844, %v1385
        %v1387 = vlaneseq
        %v1388 = vshrl.u32 %v1387, 7
        %v1389 = vsub.s32 0, %v1388
        %v1390 = vrot.slane %v845, %v1389
        %v1393 = vadd.f32 %v1033, %v1386
        %v1394 = vadd.f32 %v1082, %v1386
        %v1395 = vadd.f32 %v1131, %v1386
        %v1396 = vadd.f32 %v1180, %v1386
        %v1397 = vadd.f32 %v1229, %v1390
        %v1398 = vadd.f32 %v1278, %v1390
        %v1399 = vadd.f32 %v1327, %v1390
        %v1400 = vadd.f32 %v1376, %v1390
        %v1401 = vsel %vm991, %v1393, -inf
        %1402 = vmax.xlane.f32.xlu0 %v1401
        %v1403 = vpop.xlane.xlu0 %1402
        %v1404 = vsel %vm991, %v1394, -inf
        %1405 = vmax.xlane.f32.xlu0 %v1404
        %v1406 = vpop.xlane.xlu0 %1405
        %v1407 = vsel %vm991, %v1395, -inf
        %1408 = vmax.xlane.f32.xlu0 %v1407
        %v1409 = vpop.xlane.xlu0 %1408
        %v1410 = vsel %vm991, %v1396, -inf
        %1411 = vmax.xlane.f32.xlu0 %v1410
        %v1412 = vpop.xlane.xlu0 %1411
        %v1413 = vsel %vm991, %v1397, -inf
        %1414 = vmax.xlane.f32.xlu0 %v1413
        %v1415 = vpop.xlane.xlu0 %1414
        %v1416 = vsel %vm991, %v1398, -inf
        %1417 = vmax.xlane.f32.xlu0 %v1416
        %v1418 = vpop.xlane.xlu0 %1417
        %v1419 = vsel %vm991, %v1399, -inf
        %1420 = vmax.xlane.f32.xlu0 %v1419
        %v1421 = vpop.xlane.xlu0 %1420
        %v1422 = vsel %vm991, %v1400, -inf
        %1423 = vmax.xlane.f32.xlu0 %v1422
        %v1424 = vpop.xlane.xlu0 %1423
        %v1425 = vsub.f32 %v1393, %v1403
        %v1426 = vsub.f32 %v1394, %v1406
        %v1427 = vsub.f32 %v1395, %v1409
        %v1428 = vsub.f32 %v1396, %v1412
        %v1429 = vsub.f32 %v1397, %v1415
        %v1430 = vsub.f32 %v1398, %v1418
        %v1431 = vsub.f32 %v1399, %v1421
        %v1432 = vsub.f32 %v1400, %v1424
        %v1433 = vmul.f32 %v1425, 1.442695
        %v1434 = vpow.pop %v1433
        %v1435 = vmul.f32 %v1426, 1.442695
        %v1436 = vpow.pop %v1435
        %v1437 = vmul.f32 %v1427, 1.442695
        %v1438 = vpow.pop %v1437
        %v1439 = vmul.f32 %v1428, 1.442695
        %v1440 = vpow.pop %v1439
        %v1441 = vmul.f32 %v1429, 1.442695
        %v1442 = vpow.pop %v1441
        %v1443 = vmul.f32 %v1430, 1.442695
        %v1444 = vpow.pop %v1443
        %v1445 = vmul.f32 %v1431, 1.442695
        %v1446 = vpow.pop %v1445
        %v1447 = vmul.f32 %v1432, 1.442695
        %v1448 = vpow.pop %v1447
        %v1449 = vsel %vm991, %v1434, 0.0
        %1450 = vadd.xlane.f32.xlu0 %v1449
        %v1451 = vpop.xlane.xlu0 %1450
        %v1452 = vsel %vm991, %v1436, 0.0
        %1453 = vadd.xlane.f32.xlu0 %v1452
        %v1454 = vpop.xlane.xlu0 %1453
        %v1455 = vsel %vm991, %v1438, 0.0
        %1456 = vadd.xlane.f32.xlu0 %v1455
        %v1457 = vpop.xlane.xlu0 %1456
        %v1458 = vsel %vm991, %v1440, 0.0
        %1459 = vadd.xlane.f32.xlu0 %v1458
        %v1460 = vpop.xlane.xlu0 %1459
        %v1461 = vsel %vm991, %v1442, 0.0
        %1462 = vadd.xlane.f32.xlu0 %v1461
        %v1463 = vpop.xlane.xlu0 %1462
        %v1464 = vsel %vm991, %v1444, 0.0
        %1465 = vadd.xlane.f32.xlu0 %v1464
        %v1466 = vpop.xlane.xlu0 %1465
        %v1467 = vsel %vm991, %v1446, 0.0
        %1468 = vadd.xlane.f32.xlu0 %v1467
        %v1469 = vpop.xlane.xlu0 %1468
        %v1470 = vsel %vm991, %v1448, 0.0
        %1471 = vadd.xlane.f32.xlu0 %v1470
        %v1472 = vpop.xlane.xlu0 %1471
        %v1473 = vrcp.pop %v1451
        %v1474 = vmul.f32 %v1434, %v1473
        %v1475 = vrcp.pop %v1454
        %v1476 = vmul.f32 %v1436, %v1475
        %v1477 = vrcp.pop %v1457
        %v1478 = vmul.f32 %v1438, %v1477
        %v1479 = vrcp.pop %v1460
        %v1480 = vmul.f32 %v1440, %v1479
        %v1481 = vrcp.pop %v1463
        %v1482 = vmul.f32 %v1442, %v1481
        %v1483 = vrcp.pop %v1466
        %v1484 = vmul.f32 %v1444, %v1483
        %v1485 = vrcp.pop %v1469
        %v1486 = vmul.f32 %v1446, %v1485
        %v1487 = vrcp.pop %v1472
        %v1488 = vmul.f32 %v1448, %v1487
        %v1489 = vpack.c.bf16 %v1474, %v1474
        %v1490 = vpack.c.bf16 %v1476, %v1476
        %v1491 = vpack.c.bf16 %v1478, %v1478
        %v1492 = vpack.c.bf16 %v1480, %v1480
        %v1493 = vpack.c.bf16 %v1482, %v1482
        %v1494 = vpack.c.bf16 %v1484, %v1484
        %v1495 = vpack.c.bf16 %v1486, %v1486
        %v1496 = vpack.c.bf16 %v1488, %v1488
        %1497 = vrot.lane.b32.xlu0 %v980, 112
        %v1498 = vpop.permute.xlu0 %1497
        %v1500 = vsel %vm991, %v1489, 0
        %vm1502 = vcmask 1043456
        %v1504 = vsel %vm1502, %v1498, 0
        %1506 = vmatprep.subr.bf16.mxu0 0
        %1507 = vmatpush1.bf16.msra.mxu0 %v1504
        %1508 = vmatprep.subr.bf16.mxu0 0
        %1509 = vmatpush1.bf16.msra.mxu0 0
        %1510 = vmatprep.subr.bf16.mxu0 0
        %1511 = vmatpush1.bf16.msra.mxu0 0
        %1512 = vmatprep.subr.bf16.mxu0 0
        %1513 = vmatpush1.bf16.msra.mxu0 0
        %1514 = vmatprep.subr.bf16.mxu0 0
        %1515 = vmatpush1.bf16.msra.mxu0 0
        %1516 = vmatprep.subr.bf16.mxu0 0
        %1517 = vmatpush1.bf16.msra.mxu0 0
        %1518 = vmatprep.subr.bf16.mxu0 0
        %1519 = vmatpush1.bf16.msra.mxu0 0
        %1520 = vmatprep.subr.bf16.mxu0 0
        %1521 = vmatpush1.bf16.msra.mxu0 0
        %1522 = vmatprep.subr.bf16.mxu0 0
        %1523 = vmatpush1.bf16.msra.mxu0 0
        %1524 = vmatprep.subr.bf16.mxu0 0
        %1525 = vmatpush1.bf16.msra.mxu0 0
        %1526 = vmatprep.subr.bf16.mxu0 0
        %1527 = vmatpush1.bf16.msra.mxu0 0
        %1528 = vmatprep.subr.bf16.mxu0 0
        %1529 = vmatpush1.bf16.msra.mxu0 0
        %1530 = vmatprep.subr.bf16.mxu0 0
        %1531 = vmatpush1.bf16.msra.mxu0 0
        %1532 = vmatprep.subr.bf16.mxu0 0
        %1533 = vmatpush1.bf16.msra.mxu0 0
        %1534 = vmatprep.subr.bf16.mxu0 0
        %1535 = vmatpush1.bf16.msra.mxu0 0
        %1536 = vmatprep.subr.bf16.mxu0 0
        %1537 = vmatpush1.bf16.msra.mxu0 0
        %1538 = vmatprep.mubr.bf16.mxu0 0
        %1539 = vmatmul.mubr.bf16.gmra.mrb[0].mxu0 %v1500
        %v1540 = vpop.f32.mrb[0].mxu0
        %v1541 = vadd.f32 0.0, %v1540
        %v1542 = vpop.f32.mrb[0].mxu0
        %v1543 = vpop.f32.mrb[0].mxu0
        %v1544 = vpop.f32.mrb[0].mxu0
        %1545 = vdwg.mxu0
        %1546 = vrot.lane.b32.xlu0 %v981, 112
        %v1547 = vpop.permute.xlu0 %1546
        %v1549 = vsel %vm991, %v1490, 0
        %v1552 = vsel %vm1502, %v1547, 0
        %1554 = vmatprep.subr.bf16.mxu0 0
        %1555 = vmatpush1.bf16.msra.mxu0 %v1552
        %1556 = vmatprep.subr.bf16.mxu0 0
        %1557 = vmatpush1.bf16.msra.mxu0 0
        %1558 = vmatprep.subr.bf16.mxu0 0
        %1559 = vmatpush1.bf16.msra.mxu0 0
        %1560 = vmatprep.subr.bf16.mxu0 0
        %1561 = vmatpush1.bf16.msra.mxu0 0
        %1562 = vmatprep.subr.bf16.mxu0 0
        %1563 = vmatpush1.bf16.msra.mxu0 0
        %1564 = vmatprep.subr.bf16.mxu0 0
        %1565 = vmatpush1.bf16.msra.mxu0 0
        %1566 = vmatprep.subr.bf16.mxu0 0
        %1567 = vmatpush1.bf16.msra.mxu0 0
        %1568 = vmatprep.subr.bf16.mxu0 0
        %1569 = vmatpush1.bf16.msra.mxu0 0
        %1570 = vmatprep.subr.bf16.mxu0 0
        %1571 = vmatpush1.bf16.msra.mxu0 0
        %1572 = vmatprep.subr.bf16.mxu0 0
        %1573 = vmatpush1.bf16.msra.mxu0 0
        %1574 = vmatprep.subr.bf16.mxu0 0
        %1575 = vmatpush1.bf16.msra.mxu0 0
        %1576 = vmatprep.subr.bf16.mxu0 0
        %1577 = vmatpush1.bf16.msra.mxu0 0
        %1578 = vmatprep.subr.bf16.mxu0 0
        %1579 = vmatpush1.bf16.msra.mxu0 0
        %1580 = vmatprep.subr.bf16.mxu0 0
        %1581 = vmatpush1.bf16.msra.mxu0 0
        %1582 = vmatprep.subr.bf16.mxu0 0
        %1583 = vmatpush1.bf16.msra.mxu0 0
        %1584 = vmatprep.subr.bf16.mxu0 0
        %1585 = vmatpush1.bf16.msra.mxu0 0
        %1586 = vmatprep.mubr.bf16.mxu0 0
        %1587 = vmatmul.mubr.bf16.gmra.mrb[0].mxu0 %v1549
        %v1588 = vpop.f32.mrb[0].mxu0
        %v1589 = vadd.f32 0.0, %v1588
        %v1590 = vpop.f32.mrb[0].mxu0
        %v1591 = vpop.f32.mrb[0].mxu0
        %v1592 = vpop.f32.mrb[0].mxu0
        %1593 = vdwg.mxu0
        %1594 = vrot.lane.b32.xlu0 %v982, 112
        %v1595 = vpop.permute.xlu0 %1594
        %v1597 = vsel %vm991, %v1491, 0
        %v1600 = vsel %vm1502, %v1595, 0
        %1602 = vmatprep.subr.bf16.mxu0 0
        %1603 = vmatpush1.bf16.msra.mxu0 %v1600
        %1604 = vmatprep.subr.bf16.mxu0 0
        %1605 = vmatpush1.bf16.msra.mxu0 0
        %1606 = vmatprep.subr.bf16.mxu0 0
        %1607 = vmatpush1.bf16.msra.mxu0 0
        %1608 = vmatprep.subr.bf16.mxu0 0
        %1609 = vmatpush1.bf16.msra.mxu0 0
        %1610 = vmatprep.subr.bf16.mxu0 0
        %1611 = vmatpush1.bf16.msra.mxu0 0
        %1612 = vmatprep.subr.bf16.mxu0 0
        %1613 = vmatpush1.bf16.msra.mxu0 0
        %1614 = vmatprep.subr.bf16.mxu0 0
        %1615 = vmatpush1.bf16.msra.mxu0 0
        %1616 = vmatprep.subr.bf16.mxu0 0
        %1617 = vmatpush1.bf16.msra.mxu0 0
        %1618 = vmatprep.subr.bf16.mxu0 0
        %1619 = vmatpush1.bf16.msra.mxu0 0
        %1620 = vmatprep.subr.bf16.mxu0 0
        %1621 = vmatpush1.bf16.msra.mxu0 0
        %1622 = vmatprep.subr.bf16.mxu0 0
        %1623 = vmatpush1.bf16.msra.mxu0 0
        %1624 = vmatprep.subr.bf16.mxu0 0
        %1625 = vmatpush1.bf16.msra.mxu0 0
        %1626 = vmatprep.subr.bf16.mxu0 0
        %1627 = vmatpush1.bf16.msra.mxu0 0
        %1628 = vmatprep.subr.bf16.mxu0 0
        %1629 = vmatpush1.bf16.msra.mxu0 0
        %1630 = vmatprep.subr.bf16.mxu0 0
        %1631 = vmatpush1.bf16.msra.mxu0 0
        %1632 = vmatprep.subr.bf16.mxu0 0
        %1633 = vmatpush1.bf16.msra.mxu0 0
        %1634 = vmatprep.mubr.bf16.mxu0 0
        %1635 = vmatmul.mubr.bf16.gmra.mrb[0].mxu0 %v1597
        %v1636 = vpop.f32.mrb[0].mxu0
        %v1637 = vadd.f32 0.0, %v1636
        %v1638 = vpop.f32.mrb[0].mxu0
        %v1639 = vpop.f32.mrb[0].mxu0
        %v1640 = vpop.f32.mrb[0].mxu0
        %1641 = vdwg.mxu0
        %1642 = vrot.lane.b32.xlu0 %v983, 112
        %v1643 = vpop.permute.xlu0 %1642
        %v1645 = vsel %vm991, %v1492, 0
        %v1648 = vsel %vm1502, %v1643, 0
        %1650 = vmatprep.subr.bf16.mxu0 0
        %1651 = vmatpush1.bf16.msra.mxu0 %v1648
        %1652 = vmatprep.subr.bf16.mxu0 0
        %1653 = vmatpush1.bf16.msra.mxu0 0
        %1654 = vmatprep.subr.bf16.mxu0 0
        %1655 = vmatpush1.bf16.msra.mxu0 0
        %1656 = vmatprep.subr.bf16.mxu0 0
        %1657 = vmatpush1.bf16.msra.mxu0 0
        %1658 = vmatprep.subr.bf16.mxu0 0
        %1659 = vmatpush1.bf16.msra.mxu0 0
        %1660 = vmatprep.subr.bf16.mxu0 0
        %1661 = vmatpush1.bf16.msra.mxu0 0
        %1662 = vmatprep.subr.bf16.mxu0 0
        %1663 = vmatpush1.bf16.msra.mxu0 0
        %1664 = vmatprep.subr.bf16.mxu0 0
        %1665 = vmatpush1.bf16.msra.mxu0 0
        %1666 = vmatprep.subr.bf16.mxu0 0
        %1667 = vmatpush1.bf16.msra.mxu0 0
        %1668 = vmatprep.subr.bf16.mxu0 0
        %1669 = vmatpush1.bf16.msra.mxu0 0
        %1670 = vmatprep.subr.bf16.mxu0 0
        %1671 = vmatpush1.bf16.msra.mxu0 0
        %1672 = vmatprep.subr.bf16.mxu0 0
        %1673 = vmatpush1.bf16.msra.mxu0 0
        %1674 = vmatprep.subr.bf16.mxu0 0
        %1675 = vmatpush1.bf16.msra.mxu0 0
        %1676 = vmatprep.subr.bf16.mxu0 0
        %1677 = vmatpush1.bf16.msra.mxu0 0
        %1678 = vmatprep.subr.bf16.mxu0 0
        %1679 = vmatpush1.bf16.msra.mxu0 0
        %1680 = vmatprep.subr.bf16.mxu0 0
        %1681 = vmatpush1.bf16.msra.mxu0 0
        %1682 = vmatprep.mubr.bf16.mxu0 0
        %1683 = vmatmul.mubr.bf16.gmra.mrb[0].mxu0 %v1645
        %v1684 = vpop.f32.mrb[0].mxu0
        %v1685 = vadd.f32 0.0, %v1684
        %v1686 = vpop.f32.mrb[0].mxu0
        %v1687 = vpop.f32.mrb[0].mxu0
        %v1688 = vpop.f32.mrb[0].mxu0
        %1689 = vdwg.mxu0
        %1690 = vrot.lane.b32.xlu0 %v984, 112
        %v1691 = vpop.permute.xlu0 %1690
        %v1693 = vsel %vm991, %v1493, 0
        %v1696 = vsel %vm1502, %v1691, 0
        %1698 = vmatprep.subr.bf16.mxu0 0
        %1699 = vmatpush1.bf16.msra.mxu0 %v1696
        %1700 = vmatprep.subr.bf16.mxu0 0
        %1701 = vmatpush1.bf16.msra.mxu0 0
        %1702 = vmatprep.subr.bf16.mxu0 0
        %1703 = vmatpush1.bf16.msra.mxu0 0
        %1704 = vmatprep.subr.bf16.mxu0 0
        %1705 = vmatpush1.bf16.msra.mxu0 0
        %1706 = vmatprep.subr.bf16.mxu0 0
        %1707 = vmatpush1.bf16.msra.mxu0 0
        %1708 = vmatprep.subr.bf16.mxu0 0
        %1709 = vmatpush1.bf16.msra.mxu0 0
        %1710 = vmatprep.subr.bf16.mxu0 0
        %1711 = vmatpush1.bf16.msra.mxu0 0
        %1712 = vmatprep.subr.bf16.mxu0 0
        %1713 = vmatpush1.bf16.msra.mxu0 0
        %1714 = vmatprep.subr.bf16.mxu0 0
        %1715 = vmatpush1.bf16.msra.mxu0 0
        %1716 = vmatprep.subr.bf16.mxu0 0
        %1717 = vmatpush1.bf16.msra.mxu0 0
        %1718 = vmatprep.subr.bf16.mxu0 0
        %1719 = vmatpush1.bf16.msra.mxu0 0
        %1720 = vmatprep.subr.bf16.mxu0 0
        %1721 = vmatpush1.bf16.msra.mxu0 0
        %1722 = vmatprep.subr.bf16.mxu0 0
        %1723 = vmatpush1.bf16.msra.mxu0 0
        %1724 = vmatprep.subr.bf16.mxu0 0
        %1725 = vmatpush1.bf16.msra.mxu0 0
        %1726 = vmatprep.subr.bf16.mxu0 0
        %1727 = vmatpush1.bf16.msra.mxu0 0
        %1728 = vmatprep.subr.bf16.mxu0 0
        %1729 = vmatpush1.bf16.msra.mxu0 0
        %1730 = vmatprep.mubr.bf16.mxu0 0
        %1731 = vmatmul.mubr.bf16.gmra.mrb[0].mxu0 %v1693
        %v1732 = vpop.f32.mrb[0].mxu0
        %v1733 = vadd.f32 0.0, %v1732
        %v1734 = vpop.f32.mrb[0].mxu0
        %v1735 = vpop.f32.mrb[0].mxu0
        %v1736 = vpop.f32.mrb[0].mxu0
        %1737 = vdwg.mxu0
        %1738 = vrot.lane.b32.xlu0 %v985, 112
        %v1739 = vpop.permute.xlu0 %1738
        %v1741 = vsel %vm991, %v1494, 0
        %v1744 = vsel %vm1502, %v1739, 0
        %1746 = vmatprep.subr.bf16.mxu0 0
        %1747 = vmatpush1.bf16.msra.mxu0 %v1744
        %1748 = vmatprep.subr.bf16.mxu0 0
        %1749 = vmatpush1.bf16.msra.mxu0 0
        %1750 = vmatprep.subr.bf16.mxu0 0
        %1751 = vmatpush1.bf16.msra.mxu0 0
        %1752 = vmatprep.subr.bf16.mxu0 0
        %1753 = vmatpush1.bf16.msra.mxu0 0
        %1754 = vmatprep.subr.bf16.mxu0 0
        %1755 = vmatpush1.bf16.msra.mxu0 0
        %1756 = vmatprep.subr.bf16.mxu0 0
        %1757 = vmatpush1.bf16.msra.mxu0 0
        %1758 = vmatprep.subr.bf16.mxu0 0
        %1759 = vmatpush1.bf16.msra.mxu0 0
        %1760 = vmatprep.subr.bf16.mxu0 0
        %1761 = vmatpush1.bf16.msra.mxu0 0
        %1762 = vmatprep.subr.bf16.mxu0 0
        %1763 = vmatpush1.bf16.msra.mxu0 0
        %1764 = vmatprep.subr.bf16.mxu0 0
        %1765 = vmatpush1.bf16.msra.mxu0 0
        %1766 = vmatprep.subr.bf16.mxu0 0
        %1767 = vmatpush1.bf16.msra.mxu0 0
        %1768 = vmatprep.subr.bf16.mxu0 0
        %1769 = vmatpush1.bf16.msra.mxu0 0
        %1770 = vmatprep.subr.bf16.mxu0 0
        %1771 = vmatpush1.bf16.msra.mxu0 0
        %1772 = vmatprep.subr.bf16.mxu0 0
        %1773 = vmatpush1.bf16.msra.mxu0 0
        %1774 = vmatprep.subr.bf16.mxu0 0
        %1775 = vmatpush1.bf16.msra.mxu0 0
        %1776 = vmatprep.subr.bf16.mxu0 0
        %1777 = vmatpush1.bf16.msra.mxu0 0
        %1778 = vmatprep.mubr.bf16.mxu0 0
        %1779 = vmatmul.mubr.bf16.gmra.mrb[0].mxu0 %v1741
        %v1780 = vpop.f32.mrb[0].mxu0
        %v1781 = vadd.f32 0.0, %v1780
        %v1782 = vpop.f32.mrb[0].mxu0
        %v1783 = vpop.f32.mrb[0].mxu0
        %v1784 = vpop.f32.mrb[0].mxu0
        %1785 = vdwg.mxu0
        %1786 = vrot.lane.b32.xlu0 %v986, 112
        %v1787 = vpop.permute.xlu0 %1786
        %v1789 = vsel %vm991, %v1495, 0
        %v1792 = vsel %vm1502, %v1787, 0
        %1794 = vmatprep.subr.bf16.mxu0 0
        %1795 = vmatpush1.bf16.msra.mxu0 %v1792
        %1796 = vmatprep.subr.bf16.mxu0 0
        %1797 = vmatpush1.bf16.msra.mxu0 0
        %1798 = vmatprep.subr.bf16.mxu0 0
        %1799 = vmatpush1.bf16.msra.mxu0 0
        %1800 = vmatprep.subr.bf16.mxu0 0
        %1801 = vmatpush1.bf16.msra.mxu0 0
        %1802 = vmatprep.subr.bf16.mxu0 0
        %1803 = vmatpush1.bf16.msra.mxu0 0
        %1804 = vmatprep.subr.bf16.mxu0 0
        %1805 = vmatpush1.bf16.msra.mxu0 0
        %1806 = vmatprep.subr.bf16.mxu0 0
        %1807 = vmatpush1.bf16.msra.mxu0 0
        %1808 = vmatprep.subr.bf16.mxu0 0
        %1809 = vmatpush1.bf16.msra.mxu0 0
        %1810 = vmatprep.subr.bf16.mxu0 0
        %1811 = vmatpush1.bf16.msra.mxu0 0
        %1812 = vmatprep.subr.bf16.mxu0 0
        %1813 = vmatpush1.bf16.msra.mxu0 0
        %1814 = vmatprep.subr.bf16.mxu0 0
        %1815 = vmatpush1.bf16.msra.mxu0 0
        %1816 = vmatprep.subr.bf16.mxu0 0
        %1817 = vmatpush1.bf16.msra.mxu0 0
        %1818 = vmatprep.subr.bf16.mxu0 0
        %1819 = vmatpush1.bf16.msra.mxu0 0
        %1820 = vmatprep.subr.bf16.mxu0 0
        %1821 = vmatpush1.bf16.msra.mxu0 0
        %1822 = vmatprep.subr.bf16.mxu0 0
        %1823 = vmatpush1.bf16.msra.mxu0 0
        %1824 = vmatprep.subr.bf16.mxu0 0
        %1825 = vmatpush1.bf16.msra.mxu0 0
        %1826 = vmatprep.mubr.bf16.mxu0 0
        %1827 = vmatmul.mubr.bf16.gmra.mrb[0].mxu0 %v1789
        %v1828 = vpop.f32.mrb[0].mxu0
        %v1829 = vadd.f32 0.0, %v1828
        %v1830 = vpop.f32.mrb[0].mxu0
        %v1831 = vpop.f32.mrb[0].mxu0
        %v1832 = vpop.f32.mrb[0].mxu0
        %1833 = vdwg.mxu0
        %1834 = vrot.lane.b32.xlu0 %v987, 112
        %v1835 = vpop.permute.xlu0 %1834
        %v1837 = vsel %vm991, %v1496, 0
        %v1840 = vsel %vm1502, %v1835, 0
        %1842 = vmatprep.subr.bf16.mxu0 0
        %1843 = vmatpush1.bf16.msra.mxu0 %v1840
        %1844 = vmatprep.subr.bf16.mxu0 0
        %1845 = vmatpush1.bf16.msra.mxu0 0
        %1846 = vmatprep.subr.bf16.mxu0 0
        %1847 = vmatpush1.bf16.msra.mxu0 0
        %1848 = vmatprep.subr.bf16.mxu0 0
        %1849 = vmatpush1.bf16.msra.mxu0 0
        %1850 = vmatprep.subr.bf16.mxu0 0
        %1851 = vmatpush1.bf16.msra.mxu0 0
        %1852 = vmatprep.subr.bf16.mxu0 0
        %1853 = vmatpush1.bf16.msra.mxu0 0
        %1854 = vmatprep.subr.bf16.mxu0 0
        %1855 = vmatpush1.bf16.msra.mxu0 0
        %1856 = vmatprep.subr.bf16.mxu0 0
        %1857 = vmatpush1.bf16.msra.mxu0 0
        %1858 = vmatprep.subr.bf16.mxu0 0
        %1859 = vmatpush1.bf16.msra.mxu0 0
        %1860 = vmatprep.subr.bf16.mxu0 0
        %1861 = vmatpush1.bf16.msra.mxu0 0
        %1862 = vmatprep.subr.bf16.mxu0 0
        %1863 = vmatpush1.bf16.msra.mxu0 0
        %1864 = vmatprep.subr.bf16.mxu0 0
        %1865 = vmatpush1.bf16.msra.mxu0 0
        %1866 = vmatprep.subr.bf16.mxu0 0
        %1867 = vmatpush1.bf16.msra.mxu0 0
        %1868 = vmatprep.subr.bf16.mxu0 0
        %1869 = vmatpush1.bf16.msra.mxu0 0
        %1870 = vmatprep.subr.bf16.mxu0 0
        %1871 = vmatpush1.bf16.msra.mxu0 0
        %1872 = vmatprep.subr.bf16.mxu0 0
        %1873 = vmatpush1.bf16.msra.mxu0 0
        %1874 = vmatprep.mubr.bf16.mxu0 0
        %1875 = vmatmul.mubr.bf16.gmra.mrb[0].mxu0 %v1837
        %v1876 = vpop.f32.mrb[0].mxu0
        %v1877 = vadd.f32 0.0, %v1876
        %v1878 = vpop.f32.mrb[0].mxu0
        %v1879 = vpop.f32.mrb[0].mxu0
        %v1880 = vpop.f32.mrb[0].mxu0
        %1881 = vdwg.mxu0
        %v1882 = vld [vmem:[%s812] sm:$0xf]
        %v1883 = vld [vmem:[%s812 + $0x4] sm:$0xf]
        %v1884 = vld [vmem:[%s812 + $0x8] sm:$0xf]
        %v1885 = vld [vmem:[%s812 + $0xc] sm:$0xf]
        %v1886 = vpack.c.bf16 %v1733, %v1541
        %v1887 = vpack.c.bf16 %v1781, %v1589
        %v1889 = vsel %vm991, %v1887, 0
        %v1892 = vsel %vm1502, %v1883, 0
        %1894 = vmatprep.subr.bf16.mxu0 0
        %1895 = vmatpush1.bf16.msra.mxu0 %v1892
        %1896 = vmatprep.subr.bf16.mxu0 0
        %1897 = vmatpush1.bf16.msra.mxu0 0
        %1898 = vmatprep.subr.bf16.mxu0 0
        %1899 = vmatpush1.bf16.msra.mxu0 0
        %1900 = vmatprep.subr.bf16.mxu0 0
        %1901 = vmatpush1.bf16.msra.mxu0 0
        %1902 = vmatprep.subr.bf16.mxu0 0
        %1903 = vmatpush1.bf16.msra.mxu0 0
        %1904 = vmatprep.subr.bf16.mxu0 0
        %1905 = vmatpush1.bf16.msra.mxu0 0
        %1906 = vmatprep.subr.bf16.mxu0 0
        %1907 = vmatpush1.bf16.msra.mxu0 0
        %1908 = vmatprep.subr.bf16.mxu0 0
        %1909 = vmatpush1.bf16.msra.mxu0 0
        %1910 = vmatprep.subr.bf16.mxu0 0
        %1911 = vmatpush1.bf16.msra.mxu0 0
        %1912 = vmatprep.subr.bf16.mxu0 0
        %1913 = vmatpush1.bf16.msra.mxu0 0
        %1914 = vmatprep.subr.bf16.mxu0 0
        %1915 = vmatpush1.bf16.msra.mxu0 0
        %1916 = vmatprep.subr.bf16.mxu0 0
        %1917 = vmatpush1.bf16.msra.mxu0 0
        %1918 = vmatprep.subr.bf16.mxu0 0
        %1919 = vmatpush1.bf16.msra.mxu0 0
        %1920 = vmatprep.subr.bf16.mxu0 0
        %1921 = vmatpush1.bf16.msra.mxu0 0
        %1922 = vmatprep.subr.bf16.mxu0 0
        %1923 = vmatpush1.bf16.msra.mxu0 0
        %1924 = vmatprep.subr.bf16.mxu0 0
        %1925 = vmatpush1.bf16.msra.mxu0 0
        %1926 = vmatprep.mubr.bf16.mxu0 0
        %1927 = vmatmul.mubr.bf16.gmra.mrb[0].mxu0 %v1889
        %v1928 = vpop.f32.mrb[0].mxu0
        %v1929 = vadd.f32 0.0, %v1928
        %v1930 = vpop.f32.mrb[0].mxu0
        %v1931 = vpop.f32.mrb[0].mxu0
        %v1932 = vadd.f32 0.0, %v1931
        %v1933 = vpop.f32.mrb[0].mxu0
        %1934 = vdwg.mxu0
        %v1936 = vsel %vm991, %v1886, 0
        %v1939 = vsel %vm1502, %v1882, 0
        %1941 = vmatprep.subr.bf16.mxu0 0
        %1942 = vmatpush1.bf16.msra.mxu0 %v1939
        %1943 = vmatprep.subr.bf16.mxu0 0
        %1944 = vmatpush1.bf16.msra.mxu0 0
        %1945 = vmatprep.subr.bf16.mxu0 0
        %1946 = vmatpush1.bf16.msra.mxu0 0
        %1947 = vmatprep.subr.bf16.mxu0 0
        %1948 = vmatpush1.bf16.msra.mxu0 0
        %1949 = vmatprep.subr.bf16.mxu0 0
        %1950 = vmatpush1.bf16.msra.mxu0 0
        %1951 = vmatprep.subr.bf16.mxu0 0
        %1952 = vmatpush1.bf16.msra.mxu0 0
        %1953 = vmatprep.subr.bf16.mxu0 0
        %1954 = vmatpush1.bf16.msra.mxu0 0
        %1955 = vmatprep.subr.bf16.mxu0 0
        %1956 = vmatpush1.bf16.msra.mxu0 0
        %1957 = vmatprep.subr.bf16.mxu0 0
        %1958 = vmatpush1.bf16.msra.mxu0 0
        %1959 = vmatprep.subr.bf16.mxu0 0
        %1960 = vmatpush1.bf16.msra.mxu0 0
        %1961 = vmatprep.subr.bf16.mxu0 0
        %1962 = vmatpush1.bf16.msra.mxu0 0
        %1963 = vmatprep.subr.bf16.mxu0 0
        %1964 = vmatpush1.bf16.msra.mxu0 0
        %1965 = vmatprep.subr.bf16.mxu0 0
        %1966 = vmatpush1.bf16.msra.mxu0 0
        %1967 = vmatprep.subr.bf16.mxu0 0
        %1968 = vmatpush1.bf16.msra.mxu0 0
        %1969 = vmatprep.subr.bf16.mxu0 0
        %1970 = vmatpush1.bf16.msra.mxu0 0
        %1971 = vmatprep.subr.bf16.mxu0 0
        %1972 = vmatpush1.bf16.msra.mxu0 0
        %1973 = vmatprep.mubr.bf16.mxu0 0
        %1974 = vmatmul.mubr.bf16.gmra.mrb[0].mxu0 %v1936
        %v1975 = vpop.f32.mrb[0].mxu0
        %v1976 = vadd.f32 %v1929, %v1975
        %v1977 = vpop.f32.mrb[0].mxu0
        %v1978 = vpop.f32.mrb[0].mxu0
        %v1979 = vadd.f32 %v1932, %v1978
        %v1980 = vpop.f32.mrb[0].mxu0
        %1981 = vdwg.mxu0
        %v1982 = vpack.c.bf16 %v1829, %v1637
        %v1984 = vsel %vm991, %v1982, 0
        %v1987 = vsel %vm1502, %v1884, 0
        %1989 = vmatprep.subr.bf16.mxu0 0
        %1990 = vmatpush1.bf16.msra.mxu0 %v1987
        %1991 = vmatprep.subr.bf16.mxu0 0
        %1992 = vmatpush1.bf16.msra.mxu0 0
        %1993 = vmatprep.subr.bf16.mxu0 0
        %1994 = vmatpush1.bf16.msra.mxu0 0
        %1995 = vmatprep.subr.bf16.mxu0 0
        %1996 = vmatpush1.bf16.msra.mxu0 0
        %1997 = vmatprep.subr.bf16.mxu0 0
        %1998 = vmatpush1.bf16.msra.mxu0 0
        %1999 = vmatprep.subr.bf16.mxu0 0
        %2000 = vmatpush1.bf16.msra.mxu0 0
        %2001 = vmatprep.subr.bf16.mxu0 0
        %2002 = vmatpush1.bf16.msra.mxu0 0
        %2003 = vmatprep.subr.bf16.mxu0 0
        %2004 = vmatpush1.bf16.msra.mxu0 0
        %2005 = vmatprep.subr.bf16.mxu0 0
        %2006 = vmatpush1.bf16.msra.mxu0 0
        %2007 = vmatprep.subr.bf16.mxu0 0
        %2008 = vmatpush1.bf16.msra.mxu0 0
        %2009 = vmatprep.subr.bf16.mxu0 0
        %2010 = vmatpush1.bf16.msra.mxu0 0
        %2011 = vmatprep.subr.bf16.mxu0 0
        %2012 = vmatpush1.bf16.msra.mxu0 0
        %2013 = vmatprep.subr.bf16.mxu0 0
        %2014 = vmatpush1.bf16.msra.mxu0 0
        %2015 = vmatprep.subr.bf16.mxu0 0
        %2016 = vmatpush1.bf16.msra.mxu0 0
        %2017 = vmatprep.subr.bf16.mxu0 0
        %2018 = vmatpush1.bf16.msra.mxu0 0
        %2019 = vmatprep.subr.bf16.mxu0 0
        %2020 = vmatpush1.bf16.msra.mxu0 0
        %2021 = vmatprep.mubr.bf16.mxu0 0
        %2022 = vmatmul.mubr.bf16.gmra.mrb[0].mxu0 %v1984
        %v2023 = vpop.f32.mrb[0].mxu0
        %v2024 = vadd.f32 0.0, %v2023
        %v2025 = vpop.f32.mrb[0].mxu0
        %v2026 = vpop.f32.mrb[0].mxu0
        %v2027 = vadd.f32 0.0, %v2026
        %v2028 = vpop.f32.mrb[0].mxu0
        %2029 = vdwg.mxu0
        %v2030 = vadd.f32 %v1976, %v2024
        %v2031 = vadd.f32 %v1979, %v2027
        %v2032 = vpack.c.bf16 %v1877, %v1685
        %v2034 = vsel %vm991, %v2032, 0
        %v2037 = vsel %vm1502, %v1885, 0
        %2039 = vmatprep.subr.bf16.mxu0 0
        %2040 = vmatpush1.bf16.msra.mxu0 %v2037
        %2041 = vmatprep.subr.bf16.mxu0 0
        %2042 = vmatpush1.bf16.msra.mxu0 0
        %2043 = vmatprep.subr.bf16.mxu0 0
        %2044 = vmatpush1.bf16.msra.mxu0 0
        %2045 = vmatprep.subr.bf16.mxu0 0
        %2046 = vmatpush1.bf16.msra.mxu0 0
        %2047 = vmatprep.subr.bf16.mxu0 0
        %2048 = vmatpush1.bf16.msra.mxu0 0
        %2049 = vmatprep.subr.bf16.mxu0 0
        %2050 = vmatpush1.bf16.msra.mxu0 0
        %2051 = vmatprep.subr.bf16.mxu0 0
        %2052 = vmatpush1.bf16.msra.mxu0 0
        %2053 = vmatprep.subr.bf16.mxu0 0
        %2054 = vmatpush1.bf16.msra.mxu0 0
        %2055 = vmatprep.subr.bf16.mxu0 0
        %2056 = vmatpush1.bf16.msra.mxu0 0
        %2057 = vmatprep.subr.bf16.mxu0 0
        %2058 = vmatpush1.bf16.msra.mxu0 0
        %2059 = vmatprep.subr.bf16.mxu0 0
        %2060 = vmatpush1.bf16.msra.mxu0 0
        %2061 = vmatprep.subr.bf16.mxu0 0
        %2062 = vmatpush1.bf16.msra.mxu0 0
        %2063 = vmatprep.subr.bf16.mxu0 0
        %2064 = vmatpush1.bf16.msra.mxu0 0
        %2065 = vmatprep.subr.bf16.mxu0 0
        %2066 = vmatpush1.bf16.msra.mxu0 0
        %2067 = vmatprep.subr.bf16.mxu0 0
        %2068 = vmatpush1.bf16.msra.mxu0 0
        %2069 = vmatprep.subr.bf16.mxu0 0
        %2070 = vmatpush1.bf16.msra.mxu0 0
        %2071 = vmatprep.mubr.bf16.mxu0 0
        %2072 = vmatmul.mubr.bf16.gmra.mrb[0].mxu0 %v2034
        %v2073 = vpop.f32.mrb[0].mxu0
        %v2074 = vadd.f32 0.0, %v2073
        %v2075 = vpop.f32.mrb[0].mxu0
        %v2076 = vpop.f32.mrb[0].mxu0
        %v2077 = vadd.f32 0.0, %v2076
        %v2078 = vpop.f32.mrb[0].mxu0
        %2079 = vdwg.mxu0
        %v2080 = vadd.f32 %v2030, %v2074
        %v2081 = vadd.f32 %v2031, %v2077
        %v2082 = vadd.f32 %v842, %v2080
        %v2083 = vadd.f32 %v843, %v2081
        %v2084 = vld [vmem:[%s815] sm:$0x1]
        %v2086 = vlaneseq
        %v2087 = vshrl.u32 %v2086, 7
        %v2088 = vsub.s32 0, %v2087
        %v2089 = vrot.slane %v2084, %v2088
        %v2091 = vadd.f32 %v2082, %v2089
        %v2092 = vadd.f32 %v2083, %v2089
        %v2093 = vld [vmem:[%s818] sm:$0x1]
        %v2094 = vld [vmem:[%s677] sm:$0x1]
        %v2095 = vsel %vm848, %v2091, 0.0
        %2096 = vadd.xlane.f32.xlu0 %v2095
        %v2097 = vpop.xlane.xlu0 %2096
        %v2098 = vsel %vm848, %v2092, 0.0
        %2099 = vadd.xlane.f32.xlu0 %v2098
        %v2100 = vpop.xlane.xlu0 %2099
        %v2101 = vmul.f32 %v2097, %v855
        %v2102 = vmul.f32 %v2100, %v855
        %v2103 = vsub.f32 %v2091, %v2101
        %v2104 = vsub.f32 %v2092, %v2102
        %v2105 = vmul.f32 %v2103, %v2103
        %v2106 = vmul.f32 %v2104, %v2104
        %v2107 = vsel %vm848, %v2105, 0.0
        %2108 = vadd.xlane.f32.xlu0 %v2107
        %v2109 = vpop.xlane.xlu0 %2108
        %v2110 = vsel %vm848, %v2106, 0.0
        %2111 = vadd.xlane.f32.xlu0 %v2110
        %v2112 = vpop.xlane.xlu0 %2111
        %v2113 = vmul.f32 %v2109, %v855
        %v2114 = vmul.f32 %v2112, %v855
        %v2115 = vadd.f32 %v2113, 1e-05
        %v2116 = vadd.f32 %v2114, 1e-05
        %v2117 = vrsqrt.pop %v2115
        %v2118 = vrsqrt.pop %v2116
        %v2119 = vmul.f32 %v2103, %v2117
        %v2120 = vmul.f32 %v2104, %v2118
        %v2122 = vlaneseq
        %v2123 = vshrl.u32 %v2122, 7
        %v2124 = vsub.s32 0, %v2123
        %v2125 = vrot.slane %v2093, %v2124
        %v2127 = vmul.f32 %v2119, %v2125
        %v2128 = vmul.f32 %v2120, %v2125
        %v2130 = vlaneseq
        %v2131 = vshrl.u32 %v2130, 7
        %v2132 = vsub.s32 0, %v2131
        %v2133 = vrot.slane %v2094, %v2132
        %v2135 = vadd.f32 %v2127, %v2133
        %v2136 = vadd.f32 %v2128, %v2133
        %v2137 = vpack.c.bf16 %v2136, %v2135
        %v2138 = vld [vmem:[%s823] sm:$0xf]
        %v2139 = vld [vmem:[%s823 + $0x4] sm:$0xf]
        %v2140 = vld [vmem:[%s823 + $0x8] sm:$0xf]
        %v2141 = vld [vmem:[%s823 + $0xc] sm:$0xf]
        %v2142 = vld [vmem:[%s685] sm:$0x1]
        %v2144 = vlaneseq
        %v2145 = vshrl.u32 %v2144, 7
        %v2146 = vsub.s32 0, %v2145
        %v2147 = vrot.slane %v2142, %v2146
        %v2153 = vunpack.c.l.b16 %v2138
        %v2154 = vunpack.c.l.b16 %v2139
        %v2155 = vunpack.c.l.b16 %v2140
        %v2156 = vunpack.c.l.b16 %v2141
        %v2157 = vpack.c.b16 %v2154, %v2153
        %v2158 = vpack.c.b16 %v2156, %v2155
        %v2162 = vsel %vm848, %v2137, 0
        %2164 = vmatprep.subr.bf16.mxu0 0
        %2165 = vmatpush1.bf16.msra.mxu0 %v2157
        %2166 = vmatprep.subr.bf16.mxu0 0
        %2167 = vmatpush1.bf16.msra.mxu0 %v2158
        %2168 = vmatprep.subr.bf16.mxu0 0
        %2169 = vmatpush1.bf16.msra.mxu0 0
        %2170 = vmatprep.subr.bf16.mxu0 0
        %2171 = vmatpush1.bf16.msra.mxu0 0
        %2172 = vmatprep.subr.bf16.mxu0 0
        %2173 = vmatpush1.bf16.msra.mxu0 0
        %2174 = vmatprep.subr.bf16.mxu0 0
        %2175 = vmatpush1.bf16.msra.mxu0 0
        %2176 = vmatprep.subr.bf16.mxu0 0
        %2177 = vmatpush1.bf16.msra.mxu0 0
        %2178 = vmatprep.subr.bf16.mxu0 0
        %2179 = vmatpush1.bf16.msra.mxu0 0
        %2180 = vmatprep.subr.bf16.mxu0 0
        %2181 = vmatpush1.bf16.msra.mxu0 0
        %2182 = vmatprep.subr.bf16.mxu0 0
        %2183 = vmatpush1.bf16.msra.mxu0 0
        %2184 = vmatprep.subr.bf16.mxu0 0
        %2185 = vmatpush1.bf16.msra.mxu0 0
        %2186 = vmatprep.subr.bf16.mxu0 0
        %2187 = vmatpush1.bf16.msra.mxu0 0
        %2188 = vmatprep.subr.bf16.mxu0 0
        %2189 = vmatpush1.bf16.msra.mxu0 0
        %2190 = vmatprep.subr.bf16.mxu0 0
        %2191 = vmatpush1.bf16.msra.mxu0 0
        %2192 = vmatprep.subr.bf16.mxu0 0
        %2193 = vmatpush1.bf16.msra.mxu0 0
        %2194 = vmatprep.subr.bf16.mxu0 0
        %2195 = vmatpush1.bf16.msra.mxu0 0
        %2196 = vmatprep.mubr.bf16.mxu0 0
        %2197 = vmatmul.mubr.bf16.gmra.mrb[0].mxu0 %v2162
        %v2198 = vpop.f32.mrb[0].mxu0
        %v2199 = vadd.f32 %v2147, %v2198
        %v2200 = vpop.f32.mrb[0].mxu0
        %v2201 = vpop.f32.mrb[0].mxu0
        %v2202 = vadd.f32 %v2147, %v2201
        %v2203 = vpop.f32.mrb[0].mxu0
        %2204 = vdwg.mxu0
        %v2205 = vmul.f32 %v2199, 0.5
        %v2206 = vmul.f32 %v2202, 0.5
        %v2207 = vmul.f32 %v2199, 0.70710677
        %v2208 = vmul.f32 %v2202, 0.70710677
        %v2209 = verf.f32.pop %v2207
        %v2210 = verf.f32.pop %v2208
        %v2211 = vadd.f32 %v2209, 1.0
        %v2212 = vadd.f32 %v2210, 1.0
        %v2213 = vmul.f32 %v2205, %v2211
        %v2214 = vmul.f32 %v2206, %v2212
        %v2215 = vpack.c.bf16 %v2214, %v2213
        %v2216 = vld [vmem:[%s828] sm:$0xf]
        %v2217 = vld [vmem:[%s828 + $0x4] sm:$0xf]
        %v2218 = vld [vmem:[%s828 + $0x8] sm:$0xf]
        %v2219 = vld [vmem:[%s828 + $0xc] sm:$0xf]
        %v2220 = vld [vmem:[%s828 + $0x10] sm:$0xf]
        %v2221 = vld [vmem:[%s828 + $0x14] sm:$0xf]
        %v2222 = vld [vmem:[%s828 + $0x18] sm:$0xf]
        %v2223 = vld [vmem:[%s828 + $0x1c] sm:$0xf]
        %v2232 = vunpack.c.l.b16 %v2216
        %v2233 = vunpack.c.l.b16 %v2217
        %v2234 = vunpack.c.l.b16 %v2218
        %v2235 = vunpack.c.l.b16 %v2219
        %v2236 = vunpack.c.l.b16 %v2220
        %v2237 = vunpack.c.l.b16 %v2221
        %v2238 = vunpack.c.l.b16 %v2222
        %v2239 = vunpack.c.l.b16 %v2223
        %v2240 = vpack.c.b16 %v2233, %v2232
        %v2241 = vpack.c.b16 %v2235, %v2234
        %v2242 = vpack.c.b16 %v2237, %v2236
        %v2243 = vpack.c.b16 %v2239, %v2238
        %vm2248 = vcmask 523264
        %v2250 = vsel %vm2248, %v2215, 0
        %2252 = vmatprep.subr.bf16.mxu0 0
        %2253 = vmatpush1.bf16.msra.mxu0 %v2240
        %2254 = vmatprep.subr.bf16.mxu0 0
        %2255 = vmatpush1.bf16.msra.mxu0 %v2241
        %2256 = vmatprep.subr.bf16.mxu0 0
        %2257 = vmatpush1.bf16.msra.mxu0 %v2242
        %2258 = vmatprep.subr.bf16.mxu0 0
        %2259 = vmatpush1.bf16.msra.mxu0 %v2243
        %2260 = vmatprep.subr.bf16.mxu0 0
        %2261 = vmatpush1.bf16.msra.mxu0 0
        %2262 = vmatprep.subr.bf16.mxu0 0
        %2263 = vmatpush1.bf16.msra.mxu0 0
        %2264 = vmatprep.subr.bf16.mxu0 0
        %2265 = vmatpush1.bf16.msra.mxu0 0
        %2266 = vmatprep.subr.bf16.mxu0 0
        %2267 = vmatpush1.bf16.msra.mxu0 0
        %2268 = vmatprep.subr.bf16.mxu0 0
        %2269 = vmatpush1.bf16.msra.mxu0 0
        %2270 = vmatprep.subr.bf16.mxu0 0
        %2271 = vmatpush1.bf16.msra.mxu0 0
        %2272 = vmatprep.subr.bf16.mxu0 0
        %2273 = vmatpush1.bf16.msra.mxu0 0
        %2274 = vmatprep.subr.bf16.mxu0 0
        %2275 = vmatpush1.bf16.msra.mxu0 0
        %2276 = vmatprep.subr.bf16.mxu0 0
        %2277 = vmatpush1.bf16.msra.mxu0 0
        %2278 = vmatprep.subr.bf16.mxu0 0
        %2279 = vmatpush1.bf16.msra.mxu0 0
        %2280 = vmatprep.subr.bf16.mxu0 0
        %2281 = vmatpush1.bf16.msra.mxu0 0
        %2282 = vmatprep.subr.bf16.mxu0 0
        %2283 = vmatpush1.bf16.msra.mxu0 0
        %2284 = vmatprep.mubr.bf16.mxu0 0
        %2285 = vmatmul.mubr.bf16.gmra.mrb[0].mxu0 %v2250
        %v2286 = vpop.f32.mrb[0].mxu0
        %v2287 = vadd.f32 0.0, %v2286
        %v2288 = vpop.f32.mrb[0].mxu0
        %v2289 = vpop.f32.mrb[0].mxu0
        %v2290 = vadd.f32 0.0, %v2289
        %v2291 = vpop.f32.mrb[0].mxu0
        %2292 = vdwg.mxu0
        %v2293 = vadd.f32 %v2091, %v2287
        %v2294 = vadd.f32 %v2092, %v2290
        %v2295 = vld [vmem:[%s831] sm:$0x1]
        %v2297 = vlaneseq
        %v2298 = vshrl.u32 %v2297, 7
        %v2299 = vsub.s32 0, %v2298
        %v2300 = vrot.slane %v2295, %v2299
        %v2302 = vadd.f32 %v2293, %v2300
        %v2303 = vadd.f32 %v2294, %v2300
        %2304 = vst.msk [vmem:[#allocation2] sm:$0xff] %vm848, %v2302
        %2305 = vst.msk [vmem:[#allocation2 + $0x8] sm:$0xff] %vm848, %v2303
        %p2306 = scmp.eq.s32.totalorder %s41, 1
        // Predicated region
        $region105: #{tpu_custom_call.1} parent=91 // pred_check
          %p2307 = pneg %p2306
        $region106: #{tpu_custom_call.1} parent=91 // pred_check_branch
          %2309 = sbr.rel (%p2307) target = $region108
        $region107: #{tpu_custom_call.1} parent=91 // pred_region
          %v2310 = vld [vmem:[%s14] sm:$0x1]
          %v2311 = vld [vmem:[%s15] sm:$0x1]
          %v2312 = vsel %vm848, %v2302, 0.0
          %2313 = vadd.xlane.f32.xlu0 %v2312
          %v2314 = vpop.xlane.xlu0 %2313
          %v2315 = vsel %vm848, %v2303, 0.0
          %2316 = vadd.xlane.f32.xlu0 %v2315
          %v2317 = vpop.xlane.xlu0 %2316
          %v2318 = vmul.f32 %v2314, %v855
          %v2319 = vmul.f32 %v2317, %v855
          %v2320 = vsub.f32 %v2302, %v2318
          %v2321 = vsub.f32 %v2303, %v2319
          %v2322 = vmul.f32 %v2320, %v2320
          %v2323 = vmul.f32 %v2321, %v2321
          %v2324 = vsel %vm848, %v2322, 0.0
          %2325 = vadd.xlane.f32.xlu0 %v2324
          %v2326 = vpop.xlane.xlu0 %2325
          %v2327 = vsel %vm848, %v2323, 0.0
          %2328 = vadd.xlane.f32.xlu0 %v2327
          %v2329 = vpop.xlane.xlu0 %2328
          %v2330 = vmul.f32 %v2326, %v855
          %v2331 = vmul.f32 %v2329, %v855
          %v2332 = vadd.f32 %v2330, 1e-05
          %v2333 = vadd.f32 %v2331, 1e-05
          %v2334 = vrsqrt.pop %v2332
          %v2335 = vrsqrt.pop %v2333
          %v2336 = vmul.f32 %v2320, %v2334
          %v2337 = vmul.f32 %v2321, %v2335
          %v2339 = vlaneseq
          %v2340 = vshrl.u32 %v2339, 7
          %v2341 = vsub.s32 0, %v2340
          %v2342 = vrot.slane %v2310, %v2341
          %v2344 = vmul.f32 %v2336, %v2342
          %v2345 = vmul.f32 %v2337, %v2342
          %v2347 = vlaneseq
          %v2348 = vshrl.u32 %v2347, 7
          %v2349 = vsub.s32 0, %v2348
          %v2350 = vrot.slane %v2311, %v2349
          %v2352 = vadd.f32 %v2344, %v2350
          %v2353 = vadd.f32 %v2345, %v2350
          %v2354 = vsel %vm848, %v2352, 0.0
          %v2355 = vrot.slane %v2354, 4
          %v2356 = vadd.f32 %v2354, %v2355
          %v2357 = vrot.slane %v2356, 2
          %v2358 = vadd.f32 %v2356, %v2357
          %v2359 = vrot.slane %v2358, 1
          %v2360 = vadd.f32 %v2358, %v2359
          %v2361 = vsel %vm848, %v2353, 0.0
          %v2362 = vrot.slane %v2361, 4
          %v2363 = vadd.f32 %v2361, %v2362
          %v2364 = vrot.slane %v2363, 2
          %v2365 = vadd.f32 %v2363, %v2364
          %v2366 = vrot.slane %v2365, 1
          %v2367 = vadd.f32 %v2365, %v2366
          %v2368 = vrcp.pop 8.0
          %v2369 = vmul.f32 %v2360, %v2368
          %v2370 = vmul.f32 %v2367, %v2368
          %v2371 = vpack.c.bf16 %v2369, %v2369
          %v2372 = vpack.c.bf16 %v2370, %v2370
          %v2373 = vld [vmem:[%s16] sm:$0xf]
          %v2374 = vld [vmem:[%s16 + $0x4] sm:$0xf]
          %v2375 = vld [vmem:[%s16 + $0x8] sm:$0xf]
          %v2376 = vld [vmem:[%s16 + $0xc] sm:$0xf]
          %v2377 = vld [vmem:[%s17] sm:$0x1]
          %v2379 = vlaneseq
          %v2380 = vshrl.u32 %v2379, 7
          %v2381 = vsub.s32 0, %v2380
          %v2382 = vrot.slane %v2377, %v2381
          %v2386 = vunpack.c.l.b16 %v2371
          %v2387 = vunpack.c.l.b16 %v2372
          %vm2388 = vcmask 1041409
          %v2389 = vsel %vm2388, %v2387, %v2386
          %v2390 = vpack.c.b16 %v2389, %v2389
          %v2395 = vunpack.c.l.b16 %v2373
          %v2396 = vunpack.c.l.b16 %v2374
          %v2397 = vunpack.c.l.b16 %v2375
          %v2398 = vunpack.c.l.b16 %v2376
          %v2399 = vpack.c.b16 %v2396, %v2395
          %v2400 = vpack.c.b16 %v2398, %v2397
          %v2404 = vsel %vm848, %v2390, 0
          %2406 = vmatprep.subr.bf16.mxu0 0
          %2407 = vmatpush1.bf16.msra.mxu0 %v2399
          %2408 = vmatprep.subr.bf16.mxu0 0
          %2409 = vmatpush1.bf16.msra.mxu0 %v2400
          %2410 = vmatprep.subr.bf16.mxu0 0
          %2411 = vmatpush1.bf16.msra.mxu0 0
          %2412 = vmatprep.subr.bf16.mxu0 0
          %2413 = vmatpush1.bf16.msra.mxu0 0
          %2414 = vmatprep.subr.bf16.mxu0 0
          %2415 = vmatpush1.bf16.msra.mxu0 0
          %2416 = vmatprep.subr.bf16.mxu0 0
          %2417 = vmatpush1.bf16.msra.mxu0 0
          %2418 = vmatprep.subr.bf16.mxu0 0
          %2419 = vmatpush1.bf16.msra.mxu0 0
          %2420 = vmatprep.subr.bf16.mxu0 0
          %2421 = vmatpush1.bf16.msra.mxu0 0
          %2422 = vmatprep.subr.bf16.mxu0 0
          %2423 = vmatpush1.bf16.msra.mxu0 0
          %2424 = vmatprep.subr.bf16.mxu0 0
          %2425 = vmatpush1.bf16.msra.mxu0 0
          %2426 = vmatprep.subr.bf16.mxu0 0
          %2427 = vmatpush1.bf16.msra.mxu0 0
          %2428 = vmatprep.subr.bf16.mxu0 0
          %2429 = vmatpush1.bf16.msra.mxu0 0
          %2430 = vmatprep.subr.bf16.mxu0 0
          %2431 = vmatpush1.bf16.msra.mxu0 0
          %2432 = vmatprep.subr.bf16.mxu0 0
          %2433 = vmatpush1.bf16.msra.mxu0 0
          %2434 = vmatprep.subr.bf16.mxu0 0
          %2435 = vmatpush1.bf16.msra.mxu0 0
          %2436 = vmatprep.subr.bf16.mxu0 0
          %2437 = vmatpush1.bf16.msra.mxu0 0
          %2438 = vmatprep.mubr.bf16.mxu0 0
          %2439 = vmatmul.mubr.bf16.gmra.mrb[0].mxu0 %v2404
          %v2440 = vpop.f32.mrb[0].mxu0
          %v2441 = vadd.f32 %v2382, %v2440
          %v2442 = vpop.f32.mrb[0].mxu0
          %v2443 = vpop.f32.mrb[0].mxu0
          %v2444 = vpop.f32.mrb[0].mxu0
          %2445 = vdwg.mxu0
          %v2446 = vxor.u32 %v2441, 2147483648
          %v2447 = vmul.f32 %v2446, 1.442695
          %v2448 = vpow.pop %v2447
          %v2449 = vadd.f32 %v2448, 1.0
          %v2450 = vrcp.pop %v2449
          %v2451 = vmul.f32 1.0, %v2450
          %vm2452 = vcmask 50176
          %2453 = vst.msk [vmem:[#allocation8] sm:$0x3] %vm2452, %v2451
        $region108: #{tpu_custom_call.1} parent=91 // pred_fallthru
          _
        // Predicated region
        $region109: #{tpu_custom_call.1} parent=91 // pred_check
          %p2454 = pneg %p514
        $region110: #{tpu_custom_call.1} parent=91 // pred_check_branch
          %2456 = sbr.rel (%p2454) target = $region112
        $region111: #{tpu_custom_call.1} parent=91 // pred_region
          %s2458 = ssub.s32 32, 32
          %2459 = vsyncadd [#allocation5], %s2458
          %s2460 = smul.addr %s40, 32
          %s2461 = scalar_lea.hbm %s18, %s2460
          %s2463 = sshll.u32 [#allocation8], 4
          %s2464 = int_to_ptr.vmem [resolvable:$true] %s2463
          %2466 = dma.vmem_to_hbm [thread:$0]  %s2464, 32, %s2461, [#allocation5]
        $region112: #{tpu_custom_call.1} parent=91 // pred_fallthru
          _
        // Predicated region
        $region113: #{tpu_custom_call.1} parent=91 // pred_check
          %p2467 = pneg %p514
        $region114: #{tpu_custom_call.1} parent=91 // pred_check_branch
          %2469 = sbr.rel (%p2467) target = $region116
        $region115: #{tpu_custom_call.1} parent=91 // pred_region
          %2470 = dma.done [#allocation5], 32
        $region116: #{tpu_custom_call.1} parent=91 // pred_fallthru
          _
      $region92: #{tpu_custom_call.1} parent=5 // pred_fallthru
        _
      %p2471 = scmp.le.s32.totalorder 2, %s31
      // Predicated region
      $region117: #{tpu_custom_call.1} parent=5 // pred_check
        %p2472 = pneg %p2471
      $region118: #{tpu_custom_call.1} parent=5 // pred_check_branch
        %2474 = sbr.rel (%p2472) target = $region120
      $region119: #{tpu_custom_call.1} parent=5 // pred_region
        %s2475 = ssub.s32 %s31, 2
      $region120: #{tpu_custom_call.1} parent=5 // pred_fallthru
        _
    $region6: #{tpu_custom_call.1} parent=1 // loop_footer
      %s35 = sadd.s32 1, %s31
    $region7: #{tpu_custom_call.1} parent=1 // loop_footer_branch
      %30 = sbr.rel target = $region3
    $region8: #{tpu_custom_call.1} parent=1 // loop_exit
      _
    %2476 = vsyncpa [#allocation4], 1
    %s2477 = scalar_lea.sflag [#allocation4], 1
    %2478 = vsyncpa %s2477, 1
    %2479 = vsyncpa [#allocation7], 1
    %s2480 = scalar_lea.sflag [#allocation7], 1
    %2481 = vsyncpa %s2480, 1
    %2482 = vsyncpa [#allocation5], 1
    %s2483 = scalar_lea.sflag [#allocation5], 1
    %2484 = vsyncpa %s2483, 1

</llo_original>
